<compile_context>
chip_gen: v5e
topology: v5e:2x2
jax: 0.10.0
libtpu: 0.0.40
codegen_flags: <defaults>
</compile_context>

<pallas_src>
import math

import jax
import jax.numpy as jnp
from jax.experimental import pallas as pl
from jax.experimental.pallas import tpu as pltpu


def _biasfree_layernorm_kernel(x_ref, w_ref, o_ref):
    # x_ref: (TR, C) tile in native dtype; w_ref: (1, C); o_ref: (TR, C).
    x = x_ref[...].astype(jnp.float32)
    mu = jnp.mean(x, axis=-1, keepdims=True)             # (TR, 1) lane reduce (XLU)
    xc = x - mu
    var = jnp.mean(xc * xc, axis=-1, keepdims=True)      # unbiased=False, 2-pass (stable)
    scale = jax.lax.rsqrt(var + 1e-5)                    # EUP slot (free vs VALU)
    w = w_ref[...].astype(jnp.float32)                   # (1, C)
    # BiasFree: x is NOT centered in the output, and there is no bias term.
    o_ref[...] = (x * scale * w).astype(o_ref.dtype)


def _round_up(n, m):
    return ((n + m - 1) // m) * m


def _pick_row_block(r, c, itemsize):
    """Pick a row-block size TR (multiple of 16 sublanes, VMEM-budgeted)."""
    # Keep a single in/out buffer under ~2 MiB so double-buffered in+out stays
    # well inside v5e's 16 MiB scoped-VMEM default even for C up to ~192.
    budget = 2 * 1024 * 1024
    tr = 4096
    while tr > 128 and tr * c * itemsize > budget:
        tr //= 2
    r_up = _round_up(max(r, 1), 16)
    tr = min(tr, r_up)
    # Prefer >= 2 row blocks (when rows allow) so v7x's 2 TCs both get work;
    # blocks stay >= ~256 rows, which keeps DMA efficiency high.
    if tr >= r_up and r_up >= 512:
        tr = _round_up(r_up // 2, 16)
    return max(tr, 16)


def biasfree_layernorm(x, weight):
    """BiasFree LayerNorm over the last axis.  x: (..., C), weight: (C,)."""
    orig_shape = x.shape
    c = orig_shape[-1]
    r = math.prod(orig_shape[:-1])

    x2 = x.reshape(r, c)              # metadata-only reshape, no HBM pass
    w2 = weight.reshape(1, c)

    tr = _pick_row_block(r, c, jnp.dtype(x.dtype).itemsize)
    grid = (pl.cdiv(r, tr),)          # ragged tail handled by Pallas write-clipping

    out = pl.pallas_call(
        _biasfree_layernorm_kernel,
        grid=grid,
        in_specs=[
            pl.BlockSpec((tr, c), lambda i: (i, 0)),   # row tile, natural layout
            pl.BlockSpec((1, c), lambda i: (0, 0)),    # weight, resident
        ],
        out_specs=pl.BlockSpec((tr, c), lambda i: (i, 0)),
        out_shape=jax.ShapeDtypeStruct((r, c), x.dtype),
        compiler_params=pltpu.CompilerParams(
            dimension_semantics=("parallel",)),        # independent row blocks
    )(x2, w2)

    return out.reshape(orig_shape)


def _reference(x, weight):
    # Pure-jnp reference of the PyTorch forward (ddof=0 var, no centering, no bias).
    xf = x.astype(jnp.float32)
    var = jnp.var(xf, axis=-1, keepdims=True)
    out = xf / jnp.sqrt(var + 1e-5) * weight.astype(jnp.float32)
    return out.astype(x.dtype)


if __name__ == "__main__":
    key = jax.random.PRNGKey(0)
    k1, k2, k3 = jax.random.split(key, 3)

    fwd = jax.jit(biasfree_layernorm)

    # Restormer-like shape: (batch, tokens = h*w, channels).
    b, n, c = 2, 512, 48
    x = jax.random.normal(k1, (b, n, c), jnp.float32) * 2.0 + 0.5
    weight = jax.random.normal(k2, (c,), jnp.float32) * 0.1 + 1.0
    out = fwd(x, weight)
    jax.block_until_ready(out)
    ref = _reference(x, weight)
    assert out.shape == x.shape, out.shape
    assert jnp.allclose(out, ref, rtol=1e-5, atol=1e-5), float(jnp.max(jnp.abs(out - ref)))

    # Ragged row count (exercises the partial last block / write clipping).
    xr = jax.random.normal(k3, (3, 300, 48), jnp.float32)
    outr = fwd(xr, weight)
    jax.block_until_ready(outr)
    refr = _reference(xr, weight)
    assert outr.shape == xr.shape, outr.shape
    assert jnp.allclose(outr, refr, rtol=1e-5, atol=1e-5), float(jnp.max(jnp.abs(outr - refr)))

    print("KERNEL_OK")
</pallas_src>

<mosaic_0001>
module attributes {stable_mosaic.version = 11 : i64} {
  func.func @_biasfree_layernorm_kernel(%arg0: i32, %arg1: memref<512x48xf32, #tpu.memory_space<vmem>>, %arg2: memref<1x48xf32, #tpu.memory_space<vmem>>, %arg3: memref<512x48xf32, #tpu.memory_space<vmem>>) attributes {dimension_semantics = [#tpu.dimension_semantics<parallel>], iteration_bounds = array<i64: 2>, scalar_prefetch = 0 : i64, scratch_operands = 0 : i64, tpu.core_type = #tpu.core_type<tc>, window_params = [{transform_indices = @transform_0, window_bounds = array<i64: 512, 48>}, {pipeline_mode = #tpu.pipeline_mode<synchronous>, transform_indices = @transform_1, window_bounds = array<i64: 1, 48>}, {transform_indices = @transform_2, window_bounds = array<i64: 512, 48>}]} {
    %c0 = arith.constant 0 : index
    %c0_0 = arith.constant 0 : index
    %0 = vector.load %arg1[%c0, %c0_0] : memref<512x48xf32, #tpu.memory_space<vmem>>, vector<512x48xf32>
    %cst = arith.constant dense<0.000000e+00> : vector<512xf32>
    %1 = vector.multi_reduction <add>, %0, %cst [1] : vector<512x48xf32> to vector<512xf32>
    %2 = vector.shape_cast %1 : vector<512xf32> to vector<512x1xf32>
    %cst_1 = arith.constant 4.800000e+01 : f32
    %3 = vector.broadcast %cst_1 : f32 to vector<512x1xf32>
    %4 = arith.divf %2, %3 : vector<512x1xf32>
    %5 = vector.broadcast %4 : vector<512x1xf32> to vector<512x48xf32>
    %6 = arith.subf %0, %5 : vector<512x48xf32>
    %7 = arith.mulf %6, %6 : vector<512x48xf32>
    %cst_2 = arith.constant dense<0.000000e+00> : vector<512xf32>
    %8 = vector.multi_reduction <add>, %7, %cst_2 [1] : vector<512x48xf32> to vector<512xf32>
    %9 = vector.shape_cast %8 : vector<512xf32> to vector<512x1xf32>
    %cst_3 = arith.constant 4.800000e+01 : f32
    %10 = vector.broadcast %cst_3 : f32 to vector<512x1xf32>
    %11 = arith.divf %9, %10 : vector<512x1xf32>
    %cst_4 = arith.constant 9.99999974E-6 : f32
    %12 = vector.broadcast %cst_4 : f32 to vector<512x1xf32>
    %13 = arith.addf %11, %12 : vector<512x1xf32>
    %14 = math.rsqrt %13 : vector<512x1xf32>
    %c0_5 = arith.constant 0 : index
    %c0_6 = arith.constant 0 : index
    %15 = vector.load %arg2[%c0_5, %c0_6] : memref<1x48xf32, #tpu.memory_space<vmem>>, vector<1x48xf32>
    %16 = vector.broadcast %14 : vector<512x1xf32> to vector<512x48xf32>
    %17 = arith.mulf %0, %16 : vector<512x48xf32>
    %18 = vector.broadcast %15 : vector<1x48xf32> to vector<512x48xf32>
    %19 = arith.mulf %17, %18 : vector<512x48xf32>
    %c0_7 = arith.constant 0 : index
    %c0_8 = arith.constant 0 : index
    %20 = vector.load %arg3[%c0_7, %c0_8] : memref<512x48xf32, #tpu.memory_space<vmem>>, vector<512x48xf32>
    tpu.vector_store %arg3[%c0_7, %c0_8], %19 {strides = array<i32>} : memref<512x48xf32, #tpu.memory_space<vmem>>, vector<512x48xf32>,
    return
  }
  func.func @transform_0(%arg0: i32) -> (i32, i32) {
    %c0_i32 = arith.constant 0 : i32
    %c0_i32_0 = arith.constant 0 : i32
    return %arg0, %c0_i32 : i32, i32
  }
  func.func @transform_1(%arg0: i32) -> (i32, i32) {
    %c0_i32 = arith.constant 0 : i32
    %c0_i32_0 = arith.constant 0 : i32
    %c0_i32_1 = arith.constant 0 : i32
    return %c0_i32, %c0_i32_0 : i32, i32
  }
  func.func @transform_2(%arg0: i32) -> (i32, i32) {
    %c0_i32 = arith.constant 0 : i32
    %c0_i32_0 = arith.constant 0 : i32
    return %arg0, %c0_i32 : i32, i32
  }
}

</mosaic_0001>

<llo_original>
// kernel: biasfree_layernorm.1
$region0: #{biasfree_layernorm.1}
  #allocation0 [shape = 'u32[]', space=smem, size = 0x4, offset = 0x4, fixed_abs, tag = 'smem constant byte address 0x4 - core index']
  #allocation1 [shape = 'u32[72,128]{1,0:T(1,128)}', space=vmem, size = 0x9000, scoped, tag = 'internal scratch']
  %s0 = inlined_call_operand.vmem [shape: f32[1024,48], index: 0, kind: input, shape index: {}]
  %s1 = inlined_call_operand.vmem [shape: f32[1,48], index: 1, kind: input, shape index: {}]
  %s2 = inlined_call_operand.vmem [shape: f32[1024,48], index: 2, kind: output, shape index: {}]
  %s3 = sld [smem:[#allocation0]]
  $region41: #{biasfree_layernorm.1} parent=0
    _
  %s5 = ssub.s32 1, %s3
  %s6 = scalar_select 0, %s5, %s3
  loop: start=0, step=1, limit=4
  $region2: #{biasfree_layernorm.1} parent=0 // loop_pre_header
    _
  $region3: #{biasfree_layernorm.1} parent=0 // loop_header
    %s8 = sphi 0, %s12
    %p9 = scmp.ge.s32.totalorder %s8, 4
    %s18 = sphi 0, %s20
    %s21 = sphi 0, %s18
    %s22 = sphi 0, %s21
    %s38 = sphi 0, %s22
    %s42 = sphi 0, %s42
    %s44 = sphi 0, %s42
    %s45 = sphi 0, %s44
    %s59 = sphi 0, %s45
    %s65 = sphi 0, %s67
    %s68 = sphi 0, %s65
    %s69 = sphi 0, %s68
    %s85 = sphi 0, %s69
  $region4: #{biasfree_layernorm.1} parent=0 // loop_header_branch
    %11 = sbr.rel (%p9) target = $region8
  $region5: #{biasfree_layernorm.1} parent=0 // loop_body
    %s13 = ssub.s32 %s8, 1
    %s14 = ssub.s32 %s8, 2
    %s15 = sadd.s32 %s8, 1
    %s16 = ssub.s32 %s8, %s15
    %p17 = scmp.eq.s32.totalorder %s16, 0
    %s19 = sadd.s32 %s18, 1
    %s20 = scalar_select %p17, %s18, %s19
    %p23 = pneg %p17
    %p24 = scmp.eq.s32.totalorder %s8, 1
    %p25 = por %p23, %p24
    %p26 = scmp.ne.s32.totalorder %s18, %s21
    %p27 = scmp.eq.s32.totalorder %s8, 0
    %p28 = por %p26, %p27
    %p29 = scmp.ne.s32.totalorder %s18, %s21
    %p30 = scmp.eq.s32.totalorder %s13, 1
    %p31 = por %p29, %p30
    %p32 = scmp.ne.s32.totalorder %s21, %s22
    %p33 = scmp.eq.s32.totalorder %s13, 0
    %p34 = por %p32, %p33
    %p35 = scmp.ne.s32.totalorder %s21, %s22
    %p36 = scmp.eq.s32.totalorder %s14, 1
    %p37 = por %p35, %p36
    %p39 = scmp.ne.s32.totalorder %s22, %s38
    %p40 = scmp.eq.s32.totalorder %s14, 0
    %p41 = por %p39, %p40
    %s43 = sadd.s32 %s42, 1
    %p46 = scmp.eq.s32.totalorder %s8, 1
    %p47 = scmp.ne.s32.totalorder %s42, %s44
    %p48 = scmp.eq.s32.totalorder %s8, 0
    %p49 = por %p47, %p48
    %p50 = scmp.ne.s32.totalorder %s42, %s44
    %p51 = scmp.eq.s32.totalorder %s13, 1
    %p52 = por %p50, %p51
    %p53 = scmp.ne.s32.totalorder %s44, %s45
    %p54 = scmp.eq.s32.totalorder %s13, 0
    %p55 = por %p53, %p54
    %p56 = scmp.ne.s32.totalorder %s44, %s45
    %p57 = scmp.eq.s32.totalorder %s14, 1
    %p58 = por %p56, %p57
    %p60 = scmp.ne.s32.totalorder %s45, %s59
    %p61 = scmp.eq.s32.totalorder %s14, 0
    %p62 = por %p60, %p61
    %s63 = ssub.s32 %s8, %s15
    %p64 = scmp.eq.s32.totalorder %s63, 0
    %s66 = sadd.s32 %s65, 1
    %s67 = scalar_select %p64, %s65, %s66
    %p70 = pneg %p64
    %p71 = scmp.eq.s32.totalorder %s8, 1
    %p72 = por %p70, %p71
    %p73 = scmp.ne.s32.totalorder %s65, %s68
    %p74 = scmp.eq.s32.totalorder %s8, 0
    %p75 = por %p73, %p74
    %p76 = scmp.ne.s32.totalorder %s65, %s68
    %p77 = scmp.eq.s32.totalorder %s13, 1
    %p78 = por %p76, %p77
    %p79 = scmp.ne.s32.totalorder %s68, %s69
    %p80 = scmp.eq.s32.totalorder %s13, 0
    %p81 = por %p79, %p80
    %p82 = scmp.ne.s32.totalorder %s68, %s69
    %p83 = scmp.eq.s32.totalorder %s14, 1
    %p84 = por %p82, %p83
    %p86 = scmp.ne.s32.totalorder %s69, %s85
    %p87 = scmp.eq.s32.totalorder %s14, 0
    %p88 = por %p86, %p87
    %p89 = scmp.le.s32.totalorder 1, %s8
    %p90 = scmp.lt.s32.totalorder %s8, 3
    %p91 = pnand %p89, %p90
    %p92 = pneg %p91
    // Predicated region
    $region9: #{biasfree_layernorm.1} parent=5 // pred_check
      _
    $region10: #{biasfree_layernorm.1} parent=5 // pred_check_branch
      %94 = sbr.rel (%p91) target = $region12
    $region11: #{biasfree_layernorm.1} parent=5 // pred_region
      %s95 = ssub.s32 %s8, 1
      // Predicated region
      $region13: #{biasfree_layernorm.1} parent=11 // pred_check
        %p96 = pneg %p55
      $region14: #{biasfree_layernorm.1} parent=11 // pred_check_branch
        %98 = sbr.rel (%p96) target = $region16
      $region15: #{biasfree_layernorm.1} parent=11 // pred_region
        _
      $region16: #{biasfree_layernorm.1} parent=11 // pred_fallthru
        _
    $region12: #{biasfree_layernorm.1} parent=5 // pred_fallthru
      _
    %p99 = scmp.lt.s32.totalorder %s8, 2
    // Predicated region
    $region17: #{biasfree_layernorm.1} parent=5 // pred_check
      %p100 = pneg %p99
    $region18: #{biasfree_layernorm.1} parent=5 // pred_check_branch
      %102 = sbr.rel (%p100) target = $region20
    $region19: #{biasfree_layernorm.1} parent=5 // pred_region
      // Predicated region
      $region21: #{biasfree_layernorm.1} parent=19 // pred_check
        %p103 = pneg %p28
      $region22: #{biasfree_layernorm.1} parent=19 // pred_check_branch
        %105 = sbr.rel (%p103) target = $region24
      $region23: #{biasfree_layernorm.1} parent=19 // pred_region
        %s106 = smul.u32 64, %s8
        %p107 = scmp.lt.s32.totalorder %s106, 127
        %s108 = scalar_select %p107, %s106, 127
        %s109 = smul.addr %s108, 8
        %s110 = scalar_lea.vmem %s0, %s109
        %s111 = smul.u32 64, %s8
      $region24: #{biasfree_layernorm.1} parent=19 // pred_fallthru
        _
    $region20: #{biasfree_layernorm.1} parent=5 // pred_fallthru
      _
    %p112 = scmp.le.s32.totalorder 1, %s8
    %p113 = scmp.lt.s32.totalorder %s8, 3
    %p114 = pnand %p112, %p113
    %p115 = pneg %p114
    // Predicated region
    $region25: #{biasfree_layernorm.1} parent=5 // pred_check
      _
    $region26: #{biasfree_layernorm.1} parent=5 // pred_check_branch
      %117 = sbr.rel (%p114) target = $region28
    $region27: #{biasfree_layernorm.1} parent=5 // pred_region
      %s118 = ssub.s32 %s8, 1
      %s119 = smul.u32 64, %s13
      %p120 = scmp.lt.s32.totalorder %s119, 127
      %s121 = scalar_select %p120, %s119, 127
      %s122 = smul.addr %s121, 8
      %s123 = scalar_lea.vmem %s0, %s122
      %p124 = pneg %p34
      %p125 = pneg %p31
      %p126 = pneg %p55
      %p127 = pneg %p52
      %p128 = pneg %p81
      %p129 = pneg %p78
      %s130 = smul.u32 64, %s13
      %p131 = scmp.lt.s32.totalorder %s130, 127
      %s132 = scalar_select %p131, %s130, 127
      %s133 = smul.addr %s132, 8
      %s134 = scalar_lea.vmem %s2, %s133
      %s135 = smul.u32 64, %s13
      %p136 = scmp.lt.s32.totalorder %s135, 127
      %s137 = scalar_select %p136, %s135, 127
      %s138 = smul.addr %s137, 8
      %s139 = scalar_lea.vmem %s0, %s138
      %s140 = smul.u32 64, %s13
      %s141 = smul.u32 64, %s13
      %p142 = scmp.lt.s32.totalorder %s141, 127
      %s143 = scalar_select %p142, %s141, 127
      %s144 = smul.addr %s143, 8
      %s145 = scalar_lea.vmem %s2, %s144
      %s146 = smul.u32 64, %s13
      %v147 = vld [vmem:[%s139] sm:$0xff]
      %v148 = vld [vmem:[%s139 + $0x8] sm:$0xff]
      %v149 = vld [vmem:[%s139 + $0x10] sm:$0xff]
      %v150 = vld [vmem:[%s139 + $0x18] sm:$0xff]
      %v151 = vld [vmem:[%s139 + $0x20] sm:$0xff]
      %v152 = vld [vmem:[%s139 + $0x28] sm:$0xff]
      %v153 = vld [vmem:[%s139 + $0x30] sm:$0xff]
      %v154 = vld [vmem:[%s139 + $0x38] sm:$0xff]
      %v155 = vld [vmem:[%s139 + $0x40] sm:$0xff]
      %v156 = vld [vmem:[%s139 + $0x48] sm:$0xff]
      %v157 = vld [vmem:[%s139 + $0x50] sm:$0xff]
      %v158 = vld [vmem:[%s139 + $0x58] sm:$0xff]
      %v159 = vld [vmem:[%s139 + $0x60] sm:$0xff]
      %v160 = vld [vmem:[%s139 + $0x68] sm:$0xff]
      %v161 = vld [vmem:[%s139 + $0x70] sm:$0xff]
      %v162 = vld [vmem:[%s139 + $0x78] sm:$0xff]
      %v163 = vld [vmem:[%s139 + $0x80] sm:$0xff]
      %v164 = vld [vmem:[%s139 + $0x88] sm:$0xff]
      %v165 = vld [vmem:[%s139 + $0x90] sm:$0xff]
      %v166 = vld [vmem:[%s139 + $0x98] sm:$0xff]
      %v167 = vld [vmem:[%s139 + $0xa0] sm:$0xff]
      %v168 = vld [vmem:[%s139 + $0xa8] sm:$0xff]
      %v169 = vld [vmem:[%s139 + $0xb0] sm:$0xff]
      %v170 = vld [vmem:[%s139 + $0xb8] sm:$0xff]
      %v171 = vld [vmem:[%s139 + $0xc0] sm:$0xff]
      %v172 = vld [vmem:[%s139 + $0xc8] sm:$0xff]
      %v173 = vld [vmem:[%s139 + $0xd0] sm:$0xff]
      %v174 = vld [vmem:[%s139 + $0xd8] sm:$0xff]
      %v175 = vld [vmem:[%s139 + $0xe0] sm:$0xff]
      %v176 = vld [vmem:[%s139 + $0xe8] sm:$0xff]
      %v177 = vld [vmem:[%s139 + $0xf0] sm:$0xff]
      %v178 = vld [vmem:[%s139 + $0xf8] sm:$0xff]
      %v179 = vld [vmem:[%s139 + $0x100] sm:$0xff]
      %v180 = vld [vmem:[%s139 + $0x108] sm:$0xff]
      %v181 = vld [vmem:[%s139 + $0x110] sm:$0xff]
      %v182 = vld [vmem:[%s139 + $0x118] sm:$0xff]
      %v183 = vld [vmem:[%s139 + $0x120] sm:$0xff]
      %v184 = vld [vmem:[%s139 + $0x128] sm:$0xff]
      %v185 = vld [vmem:[%s139 + $0x130] sm:$0xff]
      %v186 = vld [vmem:[%s139 + $0x138] sm:$0xff]
      %v187 = vld [vmem:[%s139 + $0x140] sm:$0xff]
      %v188 = vld [vmem:[%s139 + $0x148] sm:$0xff]
      %v189 = vld [vmem:[%s139 + $0x150] sm:$0xff]
      %v190 = vld [vmem:[%s139 + $0x158] sm:$0xff]
      %v191 = vld [vmem:[%s139 + $0x160] sm:$0xff]
      %v192 = vld [vmem:[%s139 + $0x168] sm:$0xff]
      %v193 = vld [vmem:[%s139 + $0x170] sm:$0xff]
      %v194 = vld [vmem:[%s139 + $0x178] sm:$0xff]
      %v195 = vld [vmem:[%s139 + $0x180] sm:$0xff]
      %v196 = vld [vmem:[%s139 + $0x188] sm:$0xff]
      %v197 = vld [vmem:[%s139 + $0x190] sm:$0xff]
      %v198 = vld [vmem:[%s139 + $0x198] sm:$0xff]
      %v199 = vld [vmem:[%s139 + $0x1a0] sm:$0xff]
      %v200 = vld [vmem:[%s139 + $0x1a8] sm:$0xff]
      %v201 = vld [vmem:[%s139 + $0x1b0] sm:$0xff]
      %v202 = vld [vmem:[%s139 + $0x1b8] sm:$0xff]
      %v203 = vld [vmem:[%s139 + $0x1c0] sm:$0xff]
      %v204 = vld [vmem:[%s139 + $0x1c8] sm:$0xff]
      %v205 = vld [vmem:[%s139 + $0x1d0] sm:$0xff]
      %v206 = vld [vmem:[%s139 + $0x1d8] sm:$0xff]
      %v207 = vld [vmem:[%s139 + $0x1e0] sm:$0xff]
      %v208 = vld [vmem:[%s139 + $0x1e8] sm:$0xff]
      %v209 = vld [vmem:[%s139 + $0x1f0] sm:$0xff]
      %v210 = vld [vmem:[%s139 + $0x1f8] sm:$0xff]
      %vm211 = vcmask 392192
      %v212 = vsel %vm211, %v147, 0.0
      %213 = vadd.xlane.f32.xlu0 %v212
      %v214 = vpop.xlane.xlu0 %213
      %v215 = vsel %vm211, %v148, 0.0
      %216 = vadd.xlane.f32.xlu0 %v215
      %v217 = vpop.xlane.xlu0 %216
      %v218 = vsel %vm211, %v149, 0.0
      %219 = vadd.xlane.f32.xlu0 %v218
      %v220 = vpop.xlane.xlu0 %219
      %v221 = vsel %vm211, %v150, 0.0
      %222 = vadd.xlane.f32.xlu0 %v221
      %v223 = vpop.xlane.xlu0 %222
      %v224 = vsel %vm211, %v151, 0.0
      %225 = vadd.xlane.f32.xlu0 %v224
      %v226 = vpop.xlane.xlu0 %225
      %v227 = vsel %vm211, %v152, 0.0
      %228 = vadd.xlane.f32.xlu0 %v227
      %v229 = vpop.xlane.xlu0 %228
      %v230 = vsel %vm211, %v153, 0.0
      %231 = vadd.xlane.f32.xlu0 %v230
      %v232 = vpop.xlane.xlu0 %231
      %v233 = vsel %vm211, %v154, 0.0
      %234 = vadd.xlane.f32.xlu0 %v233
      %v235 = vpop.xlane.xlu0 %234
      %v236 = vsel %vm211, %v155, 0.0
      %237 = vadd.xlane.f32.xlu0 %v236
      %v238 = vpop.xlane.xlu0 %237
      %v239 = vsel %vm211, %v156, 0.0
      %240 = vadd.xlane.f32.xlu0 %v239
      %v241 = vpop.xlane.xlu0 %240
      %v242 = vsel %vm211, %v157, 0.0
      %243 = vadd.xlane.f32.xlu0 %v242
      %v244 = vpop.xlane.xlu0 %243
      %v245 = vsel %vm211, %v158, 0.0
      %246 = vadd.xlane.f32.xlu0 %v245
      %v247 = vpop.xlane.xlu0 %246
      %v248 = vsel %vm211, %v159, 0.0
      %249 = vadd.xlane.f32.xlu0 %v248
      %v250 = vpop.xlane.xlu0 %249
      %v251 = vsel %vm211, %v160, 0.0
      %252 = vadd.xlane.f32.xlu0 %v251
      %v253 = vpop.xlane.xlu0 %252
      %v254 = vsel %vm211, %v161, 0.0
      %255 = vadd.xlane.f32.xlu0 %v254
      %v256 = vpop.xlane.xlu0 %255
      %v257 = vsel %vm211, %v162, 0.0
      %258 = vadd.xlane.f32.xlu0 %v257
      %v259 = vpop.xlane.xlu0 %258
      %v260 = vsel %vm211, %v163, 0.0
      %261 = vadd.xlane.f32.xlu0 %v260
      %v262 = vpop.xlane.xlu0 %261
      %v263 = vsel %vm211, %v164, 0.0
      %264 = vadd.xlane.f32.xlu0 %v263
      %v265 = vpop.xlane.xlu0 %264
      %v266 = vsel %vm211, %v165, 0.0
      %267 = vadd.xlane.f32.xlu0 %v266
      %v268 = vpop.xlane.xlu0 %267
      %v269 = vsel %vm211, %v166, 0.0
      %270 = vadd.xlane.f32.xlu0 %v269
      %v271 = vpop.xlane.xlu0 %270
      %v272 = vsel %vm211, %v167, 0.0
      %273 = vadd.xlane.f32.xlu0 %v272
      %v274 = vpop.xlane.xlu0 %273
      %v275 = vsel %vm211, %v168, 0.0
      %276 = vadd.xlane.f32.xlu0 %v275
      %v277 = vpop.xlane.xlu0 %276
      %v278 = vsel %vm211, %v169, 0.0
      %279 = vadd.xlane.f32.xlu0 %v278
      %v280 = vpop.xlane.xlu0 %279
      %v281 = vsel %vm211, %v170, 0.0
      %282 = vadd.xlane.f32.xlu0 %v281
      %v283 = vpop.xlane.xlu0 %282
      %v284 = vsel %vm211, %v171, 0.0
      %285 = vadd.xlane.f32.xlu0 %v284
      %v286 = vpop.xlane.xlu0 %285
      %v287 = vsel %vm211, %v172, 0.0
      %288 = vadd.xlane.f32.xlu0 %v287
      %v289 = vpop.xlane.xlu0 %288
      %v290 = vsel %vm211, %v173, 0.0
      %291 = vadd.xlane.f32.xlu0 %v290
      %v292 = vpop.xlane.xlu0 %291
      %v293 = vsel %vm211, %v174, 0.0
      %294 = vadd.xlane.f32.xlu0 %v293
      %v295 = vpop.xlane.xlu0 %294
      %v296 = vsel %vm211, %v175, 0.0
      %297 = vadd.xlane.f32.xlu0 %v296
      %v298 = vpop.xlane.xlu0 %297
      %v299 = vsel %vm211, %v176, 0.0
      %300 = vadd.xlane.f32.xlu0 %v299
      %v301 = vpop.xlane.xlu0 %300
      %v302 = vsel %vm211, %v177, 0.0
      %303 = vadd.xlane.f32.xlu0 %v302
      %v304 = vpop.xlane.xlu0 %303
      %v305 = vsel %vm211, %v178, 0.0
      %306 = vadd.xlane.f32.xlu0 %v305
      %v307 = vpop.xlane.xlu0 %306
      %v308 = vsel %vm211, %v179, 0.0
      %309 = vadd.xlane.f32.xlu0 %v308
      %v310 = vpop.xlane.xlu0 %309
      %v311 = vsel %vm211, %v180, 0.0
      %312 = vadd.xlane.f32.xlu0 %v311
      %v313 = vpop.xlane.xlu0 %312
      %v314 = vsel %vm211, %v181, 0.0
      %315 = vadd.xlane.f32.xlu0 %v314
      %v316 = vpop.xlane.xlu0 %315
      %v317 = vsel %vm211, %v182, 0.0
      %318 = vadd.xlane.f32.xlu0 %v317
      %v319 = vpop.xlane.xlu0 %318
      %v320 = vsel %vm211, %v183, 0.0
      %321 = vadd.xlane.f32.xlu0 %v320
      %v322 = vpop.xlane.xlu0 %321
      %v323 = vsel %vm211, %v184, 0.0
      %324 = vadd.xlane.f32.xlu0 %v323
      %v325 = vpop.xlane.xlu0 %324
      %v326 = vsel %vm211, %v185, 0.0
      %327 = vadd.xlane.f32.xlu0 %v326
      %v328 = vpop.xlane.xlu0 %327
      %v329 = vsel %vm211, %v186, 0.0
      %330 = vadd.xlane.f32.xlu0 %v329
      %v331 = vpop.xlane.xlu0 %330
      %v332 = vsel %vm211, %v187, 0.0
      %333 = vadd.xlane.f32.xlu0 %v332
      %v334 = vpop.xlane.xlu0 %333
      %v335 = vsel %vm211, %v188, 0.0
      %336 = vadd.xlane.f32.xlu0 %v335
      %v337 = vpop.xlane.xlu0 %336
      %v338 = vsel %vm211, %v189, 0.0
      %339 = vadd.xlane.f32.xlu0 %v338
      %v340 = vpop.xlane.xlu0 %339
      %v341 = vsel %vm211, %v190, 0.0
      %342 = vadd.xlane.f32.xlu0 %v341
      %v343 = vpop.xlane.xlu0 %342
      %v344 = vsel %vm211, %v191, 0.0
      %345 = vadd.xlane.f32.xlu0 %v344
      %v346 = vpop.xlane.xlu0 %345
      %v347 = vsel %vm211, %v192, 0.0
      %348 = vadd.xlane.f32.xlu0 %v347
      %v349 = vpop.xlane.xlu0 %348
      %v350 = vsel %vm211, %v193, 0.0
      %351 = vadd.xlane.f32.xlu0 %v350
      %v352 = vpop.xlane.xlu0 %351
      %v353 = vsel %vm211, %v194, 0.0
      %354 = vadd.xlane.f32.xlu0 %v353
      %v355 = vpop.xlane.xlu0 %354
      %v356 = vsel %vm211, %v195, 0.0
      %357 = vadd.xlane.f32.xlu0 %v356
      %v358 = vpop.xlane.xlu0 %357
      %v359 = vsel %vm211, %v196, 0.0
      %360 = vadd.xlane.f32.xlu0 %v359
      %v361 = vpop.xlane.xlu0 %360
      %v362 = vsel %vm211, %v197, 0.0
      %363 = vadd.xlane.f32.xlu0 %v362
      %v364 = vpop.xlane.xlu0 %363
      %v365 = vsel %vm211, %v198, 0.0
      %366 = vadd.xlane.f32.xlu0 %v365
      %v367 = vpop.xlane.xlu0 %366
      %v368 = vsel %vm211, %v199, 0.0
      %369 = vadd.xlane.f32.xlu0 %v368
      %v370 = vpop.xlane.xlu0 %369
      %v371 = vsel %vm211, %v200, 0.0
      %372 = vadd.xlane.f32.xlu0 %v371
      %v373 = vpop.xlane.xlu0 %372
      %v374 = vsel %vm211, %v201, 0.0
      %375 = vadd.xlane.f32.xlu0 %v374
      %v376 = vpop.xlane.xlu0 %375
      %v377 = vsel %vm211, %v202, 0.0
      %378 = vadd.xlane.f32.xlu0 %v377
      %v379 = vpop.xlane.xlu0 %378
      %v380 = vsel %vm211, %v203, 0.0
      %381 = vadd.xlane.f32.xlu0 %v380
      %v382 = vpop.xlane.xlu0 %381
      %v383 = vsel %vm211, %v204, 0.0
      %384 = vadd.xlane.f32.xlu0 %v383
      %v385 = vpop.xlane.xlu0 %384
      %v386 = vsel %vm211, %v205, 0.0
      %387 = vadd.xlane.f32.xlu0 %v386
      %v388 = vpop.xlane.xlu0 %387
      %v389 = vsel %vm211, %v206, 0.0
      %390 = vadd.xlane.f32.xlu0 %v389
      %v391 = vpop.xlane.xlu0 %390
      %v392 = vsel %vm211, %v207, 0.0
      %393 = vadd.xlane.f32.xlu0 %v392
      %v394 = vpop.xlane.xlu0 %393
      %v395 = vsel %vm211, %v208, 0.0
      %396 = vadd.xlane.f32.xlu0 %v395
      %v397 = vpop.xlane.xlu0 %396
      %v398 = vsel %vm211, %v209, 0.0
      %399 = vadd.xlane.f32.xlu0 %v398
      %v400 = vpop.xlane.xlu0 %399
      %v401 = vsel %vm211, %v210, 0.0
      %402 = vadd.xlane.f32.xlu0 %v401
      %v403 = vpop.xlane.xlu0 %402
      %v404 = vrcp.pop 48.0
      %v405 = vmul.f32 48.0, %v404
      %v406 = vsub.f32 1.0, %v405
      %v407 = vmul.f32 %v404, %v406
      %v408 = vadd.f32 %v404, %v407
      %vm409 = vweird.f32 %v404
      %v410 = vsel %vm409, %v404, %v408
      %v411 = vmul.f32 %v214, %v410
      %v412 = vmul.f32 %v217, %v410
      %v413 = vmul.f32 %v220, %v410
      %v414 = vmul.f32 %v223, %v410
      %v415 = vmul.f32 %v226, %v410
      %v416 = vmul.f32 %v229, %v410
      %v417 = vmul.f32 %v232, %v410
      %v418 = vmul.f32 %v235, %v410
      %v419 = vmul.f32 %v238, %v410
      %v420 = vmul.f32 %v241, %v410
      %v421 = vmul.f32 %v244, %v410
      %v422 = vmul.f32 %v247, %v410
      %v423 = vmul.f32 %v250, %v410
      %v424 = vmul.f32 %v253, %v410
      %v425 = vmul.f32 %v256, %v410
      %v426 = vmul.f32 %v259, %v410
      %v427 = vmul.f32 %v262, %v410
      %v428 = vmul.f32 %v265, %v410
      %v429 = vmul.f32 %v268, %v410
      %v430 = vmul.f32 %v271, %v410
      %v431 = vmul.f32 %v274, %v410
      %v432 = vmul.f32 %v277, %v410
      %v433 = vmul.f32 %v280, %v410
      %v434 = vmul.f32 %v283, %v410
      %v435 = vmul.f32 %v286, %v410
      %v436 = vmul.f32 %v289, %v410
      %v437 = vmul.f32 %v292, %v410
      %v438 = vmul.f32 %v295, %v410
      %v439 = vmul.f32 %v298, %v410
      %v440 = vmul.f32 %v301, %v410
      %v441 = vmul.f32 %v304, %v410
      %v442 = vmul.f32 %v307, %v410
      %v443 = vmul.f32 %v310, %v410
      %v444 = vmul.f32 %v313, %v410
      %v445 = vmul.f32 %v316, %v410
      %v446 = vmul.f32 %v319, %v410
      %v447 = vmul.f32 %v322, %v410
      %v448 = vmul.f32 %v325, %v410
      %v449 = vmul.f32 %v328, %v410
      %v450 = vmul.f32 %v331, %v410
      %v451 = vmul.f32 %v334, %v410
      %v452 = vmul.f32 %v337, %v410
      %v453 = vmul.f32 %v340, %v410
      %v454 = vmul.f32 %v343, %v410
      %v455 = vmul.f32 %v346, %v410
      %v456 = vmul.f32 %v349, %v410
      %v457 = vmul.f32 %v352, %v410
      %v458 = vmul.f32 %v355, %v410
      %v459 = vmul.f32 %v358, %v410
      %v460 = vmul.f32 %v361, %v410
      %v461 = vmul.f32 %v364, %v410
      %v462 = vmul.f32 %v367, %v410
      %v463 = vmul.f32 %v370, %v410
      %v464 = vmul.f32 %v373, %v410
      %v465 = vmul.f32 %v376, %v410
      %v466 = vmul.f32 %v379, %v410
      %v467 = vmul.f32 %v382, %v410
      %v468 = vmul.f32 %v385, %v410
      %v469 = vmul.f32 %v388, %v410
      %v470 = vmul.f32 %v391, %v410
      %v471 = vmul.f32 %v394, %v410
      %v472 = vmul.f32 %v397, %v410
      %v473 = vmul.f32 %v400, %v410
      %v474 = vmul.f32 %v403, %v410
      %v475 = vsub.f32 %v147, %v411
      %v476 = vsub.f32 %v148, %v412
      %v477 = vsub.f32 %v149, %v413
      %v478 = vsub.f32 %v150, %v414
      %v479 = vsub.f32 %v151, %v415
      %v480 = vsub.f32 %v152, %v416
      %v481 = vsub.f32 %v153, %v417
      %v482 = vsub.f32 %v154, %v418
      %v483 = vsub.f32 %v155, %v419
      %v484 = vsub.f32 %v156, %v420
      %v485 = vsub.f32 %v157, %v421
      %v486 = vsub.f32 %v158, %v422
      %v487 = vsub.f32 %v159, %v423
      %v488 = vsub.f32 %v160, %v424
      %v489 = vsub.f32 %v161, %v425
      %v490 = vsub.f32 %v162, %v426
      %v491 = vsub.f32 %v163, %v427
      %v492 = vsub.f32 %v164, %v428
      %v493 = vsub.f32 %v165, %v429
      %v494 = vsub.f32 %v166, %v430
      %v495 = vsub.f32 %v167, %v431
      %v496 = vsub.f32 %v168, %v432
      %v497 = vsub.f32 %v169, %v433
      %v498 = vsub.f32 %v170, %v434
      %v499 = vsub.f32 %v171, %v435
      %v500 = vsub.f32 %v172, %v436
      %v501 = vsub.f32 %v173, %v437
      %v502 = vsub.f32 %v174, %v438
      %v503 = vsub.f32 %v175, %v439
      %v504 = vsub.f32 %v176, %v440
      %v505 = vsub.f32 %v177, %v441
      %v506 = vsub.f32 %v178, %v442
      %v507 = vsub.f32 %v179, %v443
      %v508 = vsub.f32 %v180, %v444
      %v509 = vsub.f32 %v181, %v445
      %v510 = vsub.f32 %v182, %v446
      %v511 = vsub.f32 %v183, %v447
      %v512 = vsub.f32 %v184, %v448
      %v513 = vsub.f32 %v185, %v449
      %v514 = vsub.f32 %v186, %v450
      %v515 = vsub.f32 %v187, %v451
      %v516 = vsub.f32 %v188, %v452
      %v517 = vsub.f32 %v189, %v453
      %v518 = vsub.f32 %v190, %v454
      %v519 = vsub.f32 %v191, %v455
      %v520 = vsub.f32 %v192, %v456
      %v521 = vsub.f32 %v193, %v457
      %v522 = vsub.f32 %v194, %v458
      %v523 = vsub.f32 %v195, %v459
      %v524 = vsub.f32 %v196, %v460
      %v525 = vsub.f32 %v197, %v461
      %v526 = vsub.f32 %v198, %v462
      %v527 = vsub.f32 %v199, %v463
      %v528 = vsub.f32 %v200, %v464
      %v529 = vsub.f32 %v201, %v465
      %v530 = vsub.f32 %v202, %v466
      %v531 = vsub.f32 %v203, %v467
      %v532 = vsub.f32 %v204, %v468
      %v533 = vsub.f32 %v205, %v469
      %v534 = vsub.f32 %v206, %v470
      %v535 = vsub.f32 %v207, %v471
      %v536 = vsub.f32 %v208, %v472
      %v537 = vsub.f32 %v209, %v473
      %v538 = vsub.f32 %v210, %v474
      %v539 = vmul.f32 %v475, %v475
      %v540 = vmul.f32 %v476, %v476
      %v541 = vmul.f32 %v477, %v477
      %v542 = vmul.f32 %v478, %v478
      %v543 = vmul.f32 %v479, %v479
      %v544 = vmul.f32 %v480, %v480
      %v545 = vmul.f32 %v481, %v481
      %v546 = vmul.f32 %v482, %v482
      %v547 = vmul.f32 %v483, %v483
      %v548 = vmul.f32 %v484, %v484
      %v549 = vmul.f32 %v485, %v485
      %v550 = vmul.f32 %v486, %v486
      %v551 = vmul.f32 %v487, %v487
      %v552 = vmul.f32 %v488, %v488
      %v553 = vmul.f32 %v489, %v489
      %v554 = vmul.f32 %v490, %v490
      %v555 = vmul.f32 %v491, %v491
      %v556 = vmul.f32 %v492, %v492
      %v557 = vmul.f32 %v493, %v493
      %v558 = vmul.f32 %v494, %v494
      %v559 = vmul.f32 %v495, %v495
      %v560 = vmul.f32 %v496, %v496
      %v561 = vmul.f32 %v497, %v497
      %v562 = vmul.f32 %v498, %v498
      %v563 = vmul.f32 %v499, %v499
      %v564 = vmul.f32 %v500, %v500
      %v565 = vmul.f32 %v501, %v501
      %v566 = vmul.f32 %v502, %v502
      %v567 = vmul.f32 %v503, %v503
      %v568 = vmul.f32 %v504, %v504
      %v569 = vmul.f32 %v505, %v505
      %v570 = vmul.f32 %v506, %v506
      %v571 = vmul.f32 %v507, %v507
      %v572 = vmul.f32 %v508, %v508
      %v573 = vmul.f32 %v509, %v509
      %v574 = vmul.f32 %v510, %v510
      %v575 = vmul.f32 %v511, %v511
      %v576 = vmul.f32 %v512, %v512
      %v577 = vmul.f32 %v513, %v513
      %v578 = vmul.f32 %v514, %v514
      %v579 = vmul.f32 %v515, %v515
      %v580 = vmul.f32 %v516, %v516
      %v581 = vmul.f32 %v517, %v517
      %v582 = vmul.f32 %v518, %v518
      %v583 = vmul.f32 %v519, %v519
      %v584 = vmul.f32 %v520, %v520
      %v585 = vmul.f32 %v521, %v521
      %v586 = vmul.f32 %v522, %v522
      %v587 = vmul.f32 %v523, %v523
      %v588 = vmul.f32 %v524, %v524
      %v589 = vmul.f32 %v525, %v525
      %v590 = vmul.f32 %v526, %v526
      %v591 = vmul.f32 %v527, %v527
      %v592 = vmul.f32 %v528, %v528
      %v593 = vmul.f32 %v529, %v529
      %v594 = vmul.f32 %v530, %v530
      %v595 = vmul.f32 %v531, %v531
      %v596 = vmul.f32 %v532, %v532
      %v597 = vmul.f32 %v533, %v533
      %v598 = vmul.f32 %v534, %v534
      %v599 = vmul.f32 %v535, %v535
      %v600 = vmul.f32 %v536, %v536
      %v601 = vmul.f32 %v537, %v537
      %v602 = vmul.f32 %v538, %v538
      %v603 = vsel %vm211, %v539, 0.0
      %604 = vadd.xlane.f32.xlu0 %v603
      %v605 = vpop.xlane.xlu0 %604
      %v606 = vsel %vm211, %v540, 0.0
      %607 = vadd.xlane.f32.xlu0 %v606
      %v608 = vpop.xlane.xlu0 %607
      %v609 = vsel %vm211, %v541, 0.0
      %610 = vadd.xlane.f32.xlu0 %v609
      %v611 = vpop.xlane.xlu0 %610
      %v612 = vsel %vm211, %v542, 0.0
      %613 = vadd.xlane.f32.xlu0 %v612
      %v614 = vpop.xlane.xlu0 %613
      %v615 = vsel %vm211, %v543, 0.0
      %616 = vadd.xlane.f32.xlu0 %v615
      %v617 = vpop.xlane.xlu0 %616
      %v618 = vsel %vm211, %v544, 0.0
      %619 = vadd.xlane.f32.xlu0 %v618
      %v620 = vpop.xlane.xlu0 %619
      %v621 = vsel %vm211, %v545, 0.0
      %622 = vadd.xlane.f32.xlu0 %v621
      %v623 = vpop.xlane.xlu0 %622
      %v624 = vsel %vm211, %v546, 0.0
      %625 = vadd.xlane.f32.xlu0 %v624
      %v626 = vpop.xlane.xlu0 %625
      %v627 = vsel %vm211, %v547, 0.0
      %628 = vadd.xlane.f32.xlu0 %v627
      %v629 = vpop.xlane.xlu0 %628
      %v630 = vsel %vm211, %v548, 0.0
      %631 = vadd.xlane.f32.xlu0 %v630
      %v632 = vpop.xlane.xlu0 %631
      %v633 = vsel %vm211, %v549, 0.0
      %634 = vadd.xlane.f32.xlu0 %v633
      %v635 = vpop.xlane.xlu0 %634
      %v636 = vsel %vm211, %v550, 0.0
      %637 = vadd.xlane.f32.xlu0 %v636
      %v638 = vpop.xlane.xlu0 %637
      %v639 = vsel %vm211, %v551, 0.0
      %640 = vadd.xlane.f32.xlu0 %v639
      %v641 = vpop.xlane.xlu0 %640
      %v642 = vsel %vm211, %v552, 0.0
      %643 = vadd.xlane.f32.xlu0 %v642
      %v644 = vpop.xlane.xlu0 %643
      %v645 = vsel %vm211, %v553, 0.0
      %646 = vadd.xlane.f32.xlu0 %v645
      %v647 = vpop.xlane.xlu0 %646
      %v648 = vsel %vm211, %v554, 0.0
      %649 = vadd.xlane.f32.xlu0 %v648
      %v650 = vpop.xlane.xlu0 %649
      %v651 = vsel %vm211, %v555, 0.0
      %652 = vadd.xlane.f32.xlu0 %v651
      %v653 = vpop.xlane.xlu0 %652
      %v654 = vsel %vm211, %v556, 0.0
      %655 = vadd.xlane.f32.xlu0 %v654
      %v656 = vpop.xlane.xlu0 %655
      %v657 = vsel %vm211, %v557, 0.0
      %658 = vadd.xlane.f32.xlu0 %v657
      %v659 = vpop.xlane.xlu0 %658
      %v660 = vsel %vm211, %v558, 0.0
      %661 = vadd.xlane.f32.xlu0 %v660
      %v662 = vpop.xlane.xlu0 %661
      %v663 = vsel %vm211, %v559, 0.0
      %664 = vadd.xlane.f32.xlu0 %v663
      %v665 = vpop.xlane.xlu0 %664
      %v666 = vsel %vm211, %v560, 0.0
      %667 = vadd.xlane.f32.xlu0 %v666
      %v668 = vpop.xlane.xlu0 %667
      %v669 = vsel %vm211, %v561, 0.0
      %670 = vadd.xlane.f32.xlu0 %v669
      %v671 = vpop.xlane.xlu0 %670
      %v672 = vsel %vm211, %v562, 0.0
      %673 = vadd.xlane.f32.xlu0 %v672
      %v674 = vpop.xlane.xlu0 %673
      %v675 = vsel %vm211, %v563, 0.0
      %676 = vadd.xlane.f32.xlu0 %v675
      %v677 = vpop.xlane.xlu0 %676
      %v678 = vsel %vm211, %v564, 0.0
      %679 = vadd.xlane.f32.xlu0 %v678
      %v680 = vpop.xlane.xlu0 %679
      %v681 = vsel %vm211, %v565, 0.0
      %682 = vadd.xlane.f32.xlu0 %v681
      %v683 = vpop.xlane.xlu0 %682
      %v684 = vsel %vm211, %v566, 0.0
      %685 = vadd.xlane.f32.xlu0 %v684
      %v686 = vpop.xlane.xlu0 %685
      %v687 = vsel %vm211, %v567, 0.0
      %688 = vadd.xlane.f32.xlu0 %v687
      %v689 = vpop.xlane.xlu0 %688
      %v690 = vsel %vm211, %v568, 0.0
      %691 = vadd.xlane.f32.xlu0 %v690
      %v692 = vpop.xlane.xlu0 %691
      %v693 = vsel %vm211, %v569, 0.0
      %694 = vadd.xlane.f32.xlu0 %v693
      %v695 = vpop.xlane.xlu0 %694
      %v696 = vsel %vm211, %v570, 0.0
      %697 = vadd.xlane.f32.xlu0 %v696
      %v698 = vpop.xlane.xlu0 %697
      %v699 = vsel %vm211, %v571, 0.0
      %700 = vadd.xlane.f32.xlu0 %v699
      %v701 = vpop.xlane.xlu0 %700
      %v702 = vsel %vm211, %v572, 0.0
      %703 = vadd.xlane.f32.xlu0 %v702
      %v704 = vpop.xlane.xlu0 %703
      %v705 = vsel %vm211, %v573, 0.0
      %706 = vadd.xlane.f32.xlu0 %v705
      %v707 = vpop.xlane.xlu0 %706
      %v708 = vsel %vm211, %v574, 0.0
      %709 = vadd.xlane.f32.xlu0 %v708
      %v710 = vpop.xlane.xlu0 %709
      %v711 = vsel %vm211, %v575, 0.0
      %712 = vadd.xlane.f32.xlu0 %v711
      %v713 = vpop.xlane.xlu0 %712
      %v714 = vsel %vm211, %v576, 0.0
      %715 = vadd.xlane.f32.xlu0 %v714
      %v716 = vpop.xlane.xlu0 %715
      %v717 = vsel %vm211, %v577, 0.0
      %718 = vadd.xlane.f32.xlu0 %v717
      %v719 = vpop.xlane.xlu0 %718
      %v720 = vsel %vm211, %v578, 0.0
      %721 = vadd.xlane.f32.xlu0 %v720
      %v722 = vpop.xlane.xlu0 %721
      %v723 = vsel %vm211, %v579, 0.0
      %724 = vadd.xlane.f32.xlu0 %v723
      %v725 = vpop.xlane.xlu0 %724
      %v726 = vsel %vm211, %v580, 0.0
      %727 = vadd.xlane.f32.xlu0 %v726
      %v728 = vpop.xlane.xlu0 %727
      %v729 = vsel %vm211, %v581, 0.0
      %730 = vadd.xlane.f32.xlu0 %v729
      %v731 = vpop.xlane.xlu0 %730
      %v732 = vsel %vm211, %v582, 0.0
      %733 = vadd.xlane.f32.xlu0 %v732
      %v734 = vpop.xlane.xlu0 %733
      %v735 = vsel %vm211, %v583, 0.0
      %736 = vadd.xlane.f32.xlu0 %v735
      %v737 = vpop.xlane.xlu0 %736
      %v738 = vsel %vm211, %v584, 0.0
      %739 = vadd.xlane.f32.xlu0 %v738
      %v740 = vpop.xlane.xlu0 %739
      %v741 = vsel %vm211, %v585, 0.0
      %742 = vadd.xlane.f32.xlu0 %v741
      %v743 = vpop.xlane.xlu0 %742
      %v744 = vsel %vm211, %v586, 0.0
      %745 = vadd.xlane.f32.xlu0 %v744
      %v746 = vpop.xlane.xlu0 %745
      %v747 = vsel %vm211, %v587, 0.0
      %748 = vadd.xlane.f32.xlu0 %v747
      %v749 = vpop.xlane.xlu0 %748
      %v750 = vsel %vm211, %v588, 0.0
      %751 = vadd.xlane.f32.xlu0 %v750
      %v752 = vpop.xlane.xlu0 %751
      %v753 = vsel %vm211, %v589, 0.0
      %754 = vadd.xlane.f32.xlu0 %v753
      %v755 = vpop.xlane.xlu0 %754
      %v756 = vsel %vm211, %v590, 0.0
      %757 = vadd.xlane.f32.xlu0 %v756
      %v758 = vpop.xlane.xlu0 %757
      %v759 = vsel %vm211, %v591, 0.0
      %760 = vadd.xlane.f32.xlu0 %v759
      %v761 = vpop.xlane.xlu0 %760
      %v762 = vsel %vm211, %v592, 0.0
      %763 = vadd.xlane.f32.xlu0 %v762
      %v764 = vpop.xlane.xlu0 %763
      %v765 = vsel %vm211, %v593, 0.0
      %766 = vadd.xlane.f32.xlu0 %v765
      %v767 = vpop.xlane.xlu0 %766
      %v768 = vsel %vm211, %v594, 0.0
      %769 = vadd.xlane.f32.xlu0 %v768
      %v770 = vpop.xlane.xlu0 %769
      %v771 = vsel %vm211, %v595, 0.0
      %772 = vadd.xlane.f32.xlu0 %v771
      %v773 = vpop.xlane.xlu0 %772
      %v774 = vsel %vm211, %v596, 0.0
      %775 = vadd.xlane.f32.xlu0 %v774
      %v776 = vpop.xlane.xlu0 %775
      %v777 = vsel %vm211, %v597, 0.0
      %778 = vadd.xlane.f32.xlu0 %v777
      %v779 = vpop.xlane.xlu0 %778
      %v780 = vsel %vm211, %v598, 0.0
      %781 = vadd.xlane.f32.xlu0 %v780
      %v782 = vpop.xlane.xlu0 %781
      %v783 = vsel %vm211, %v599, 0.0
      %784 = vadd.xlane.f32.xlu0 %v783
      %v785 = vpop.xlane.xlu0 %784
      %v786 = vsel %vm211, %v600, 0.0
      %787 = vadd.xlane.f32.xlu0 %v786
      %v788 = vpop.xlane.xlu0 %787
      %v789 = vsel %vm211, %v601, 0.0
      %790 = vadd.xlane.f32.xlu0 %v789
      %v791 = vpop.xlane.xlu0 %790
      %v792 = vsel %vm211, %v602, 0.0
      %793 = vadd.xlane.f32.xlu0 %v792
      %v794 = vpop.xlane.xlu0 %793
      %v795 = vmul.f32 %v605, %v410
      %v796 = vmul.f32 %v608, %v410
      %v797 = vmul.f32 %v611, %v410
      %v798 = vmul.f32 %v614, %v410
      %v799 = vmul.f32 %v617, %v410
      %v800 = vmul.f32 %v620, %v410
      %v801 = vmul.f32 %v623, %v410
      %v802 = vmul.f32 %v626, %v410
      %v803 = vmul.f32 %v629, %v410
      %v804 = vmul.f32 %v632, %v410
      %v805 = vmul.f32 %v635, %v410
      %v806 = vmul.f32 %v638, %v410
      %v807 = vmul.f32 %v641, %v410
      %v808 = vmul.f32 %v644, %v410
      %v809 = vmul.f32 %v647, %v410
      %v810 = vmul.f32 %v650, %v410
      %v811 = vmul.f32 %v653, %v410
      %v812 = vmul.f32 %v656, %v410
      %v813 = vmul.f32 %v659, %v410
      %v814 = vmul.f32 %v662, %v410
      %v815 = vmul.f32 %v665, %v410
      %v816 = vmul.f32 %v668, %v410
      %v817 = vmul.f32 %v671, %v410
      %v818 = vmul.f32 %v674, %v410
      %v819 = vmul.f32 %v677, %v410
      %v820 = vmul.f32 %v680, %v410
      %v821 = vmul.f32 %v683, %v410
      %v822 = vmul.f32 %v686, %v410
      %v823 = vmul.f32 %v689, %v410
      %v824 = vmul.f32 %v692, %v410
      %v825 = vmul.f32 %v695, %v410
      %v826 = vmul.f32 %v698, %v410
      %v827 = vmul.f32 %v701, %v410
      %v828 = vmul.f32 %v704, %v410
      %v829 = vmul.f32 %v707, %v410
      %v830 = vmul.f32 %v710, %v410
      %v831 = vmul.f32 %v713, %v410
      %v832 = vmul.f32 %v716, %v410
      %v833 = vmul.f32 %v719, %v410
      %v834 = vmul.f32 %v722, %v410
      %v835 = vmul.f32 %v725, %v410
      %v836 = vmul.f32 %v728, %v410
      %v837 = vmul.f32 %v731, %v410
      %v838 = vmul.f32 %v734, %v410
      %v839 = vmul.f32 %v737, %v410
      %v840 = vmul.f32 %v740, %v410
      %v841 = vmul.f32 %v743, %v410
      %v842 = vmul.f32 %v746, %v410
      %v843 = vmul.f32 %v749, %v410
      %v844 = vmul.f32 %v752, %v410
      %v845 = vmul.f32 %v755, %v410
      %v846 = vmul.f32 %v758, %v410
      %v847 = vmul.f32 %v761, %v410
      %v848 = vmul.f32 %v764, %v410
      %v849 = vmul.f32 %v767, %v410
      %v850 = vmul.f32 %v770, %v410
      %v851 = vmul.f32 %v773, %v410
      %v852 = vmul.f32 %v776, %v410
      %v853 = vmul.f32 %v779, %v410
      %v854 = vmul.f32 %v782, %v410
      %v855 = vmul.f32 %v785, %v410
      %v856 = vmul.f32 %v788, %v410
      %v857 = vmul.f32 %v791, %v410
      %v858 = vmul.f32 %v794, %v410
      %v859 = vadd.f32 %v795, 1e-05
      %v860 = vadd.f32 %v796, 1e-05
      %v861 = vadd.f32 %v797, 1e-05
      %v862 = vadd.f32 %v798, 1e-05
      %v863 = vadd.f32 %v799, 1e-05
      %v864 = vadd.f32 %v800, 1e-05
      %v865 = vadd.f32 %v801, 1e-05
      %v866 = vadd.f32 %v802, 1e-05
      %v867 = vadd.f32 %v803, 1e-05
      %v868 = vadd.f32 %v804, 1e-05
      %v869 = vadd.f32 %v805, 1e-05
      %v870 = vadd.f32 %v806, 1e-05
      %v871 = vadd.f32 %v807, 1e-05
      %v872 = vadd.f32 %v808, 1e-05
      %v873 = vadd.f32 %v809, 1e-05
      %v874 = vadd.f32 %v810, 1e-05
      %v875 = vadd.f32 %v811, 1e-05
      %v876 = vadd.f32 %v812, 1e-05
      %v877 = vadd.f32 %v813, 1e-05
      %v878 = vadd.f32 %v814, 1e-05
      %v879 = vadd.f32 %v815, 1e-05
      %v880 = vadd.f32 %v816, 1e-05
      %v881 = vadd.f32 %v817, 1e-05
      %v882 = vadd.f32 %v818, 1e-05
      %v883 = vadd.f32 %v819, 1e-05
      %v884 = vadd.f32 %v820, 1e-05
      %v885 = vadd.f32 %v821, 1e-05
      %v886 = vadd.f32 %v822, 1e-05
      %v887 = vadd.f32 %v823, 1e-05
      %v888 = vadd.f32 %v824, 1e-05
      %v889 = vadd.f32 %v825, 1e-05
      %v890 = vadd.f32 %v826, 1e-05
      %v891 = vadd.f32 %v827, 1e-05
      %v892 = vadd.f32 %v828, 1e-05
      %v893 = vadd.f32 %v829, 1e-05
      %v894 = vadd.f32 %v830, 1e-05
      %v895 = vadd.f32 %v831, 1e-05
      %v896 = vadd.f32 %v832, 1e-05
      %v897 = vadd.f32 %v833, 1e-05
      %v898 = vadd.f32 %v834, 1e-05
      %v899 = vadd.f32 %v835, 1e-05
      %v900 = vadd.f32 %v836, 1e-05
      %v901 = vadd.f32 %v837, 1e-05
      %v902 = vadd.f32 %v838, 1e-05
      %v903 = vadd.f32 %v839, 1e-05
      %v904 = vadd.f32 %v840, 1e-05
      %v905 = vadd.f32 %v841, 1e-05
      %v906 = vadd.f32 %v842, 1e-05
      %v907 = vadd.f32 %v843, 1e-05
      %v908 = vadd.f32 %v844, 1e-05
      %v909 = vadd.f32 %v845, 1e-05
      %v910 = vadd.f32 %v846, 1e-05
      %v911 = vadd.f32 %v847, 1e-05
      %v912 = vadd.f32 %v848, 1e-05
      %v913 = vadd.f32 %v849, 1e-05
      %v914 = vadd.f32 %v850, 1e-05
      %v915 = vadd.f32 %v851, 1e-05
      %v916 = vadd.f32 %v852, 1e-05
      %v917 = vadd.f32 %v853, 1e-05
      %v918 = vadd.f32 %v854, 1e-05
      %v919 = vadd.f32 %v855, 1e-05
      %v920 = vadd.f32 %v856, 1e-05
      %v921 = vadd.f32 %v857, 1e-05
      %v922 = vadd.f32 %v858, 1e-05
      %v923 = vrsqrt.pop %v859
      %v924 = vmul.f32 %v923, %v859
      %v925 = vmul.f32 %v924, %v923
      %v926 = vmul.f32 0.5, %v925
      %v927 = vsub.f32 1.5, %v926
      %v928 = vmul.f32 %v923, %v927
      %vm929 = vweird.f32 %v859
      %vm930 = vweird.f32 %v923
      %vm931 = vmor %vm929, %vm930
      %v932 = vsel %vm931, %v923, %v928
      %v933 = vrsqrt.pop %v860
      %v934 = vmul.f32 %v933, %v860
      %v935 = vmul.f32 %v934, %v933
      %v936 = vmul.f32 0.5, %v935
      %v937 = vsub.f32 1.5, %v936
      %v938 = vmul.f32 %v933, %v937
      %vm939 = vweird.f32 %v860
      %vm940 = vweird.f32 %v933
      %vm941 = vmor %vm939, %vm940
      %v942 = vsel %vm941, %v933, %v938
      %v943 = vrsqrt.pop %v861
      %v944 = vmul.f32 %v943, %v861
      %v945 = vmul.f32 %v944, %v943
      %v946 = vmul.f32 0.5, %v945
      %v947 = vsub.f32 1.5, %v946
      %v948 = vmul.f32 %v943, %v947
      %vm949 = vweird.f32 %v861
      %vm950 = vweird.f32 %v943
      %vm951 = vmor %vm949, %vm950
      %v952 = vsel %vm951, %v943, %v948
      %v953 = vrsqrt.pop %v862
      %v954 = vmul.f32 %v953, %v862
      %v955 = vmul.f32 %v954, %v953
      %v956 = vmul.f32 0.5, %v955
      %v957 = vsub.f32 1.5, %v956
      %v958 = vmul.f32 %v953, %v957
      %vm959 = vweird.f32 %v862
      %vm960 = vweird.f32 %v953
      %vm961 = vmor %vm959, %vm960
      %v962 = vsel %vm961, %v953, %v958
      %v963 = vrsqrt.pop %v863
      %v964 = vmul.f32 %v963, %v863
      %v965 = vmul.f32 %v964, %v963
      %v966 = vmul.f32 0.5, %v965
      %v967 = vsub.f32 1.5, %v966
      %v968 = vmul.f32 %v963, %v967
      %vm969 = vweird.f32 %v863
      %vm970 = vweird.f32 %v963
      %vm971 = vmor %vm969, %vm970
      %v972 = vsel %vm971, %v963, %v968
      %v973 = vrsqrt.pop %v864
      %v974 = vmul.f32 %v973, %v864
      %v975 = vmul.f32 %v974, %v973
      %v976 = vmul.f32 0.5, %v975
      %v977 = vsub.f32 1.5, %v976
      %v978 = vmul.f32 %v973, %v977
      %vm979 = vweird.f32 %v864
      %vm980 = vweird.f32 %v973
      %vm981 = vmor %vm979, %vm980
      %v982 = vsel %vm981, %v973, %v978
      %v983 = vrsqrt.pop %v865
      %v984 = vmul.f32 %v983, %v865
      %v985 = vmul.f32 %v984, %v983
      %v986 = vmul.f32 0.5, %v985
      %v987 = vsub.f32 1.5, %v986
      %v988 = vmul.f32 %v983, %v987
      %vm989 = vweird.f32 %v865
      %vm990 = vweird.f32 %v983
      %vm991 = vmor %vm989, %vm990
      %v992 = vsel %vm991, %v983, %v988
      %v993 = vrsqrt.pop %v866
      %v994 = vmul.f32 %v993, %v866
      %v995 = vmul.f32 %v994, %v993
      %v996 = vmul.f32 0.5, %v995
      %v997 = vsub.f32 1.5, %v996
      %v998 = vmul.f32 %v993, %v997
      %vm999 = vweird.f32 %v866
      %vm1000 = vweird.f32 %v993
      %vm1001 = vmor %vm999, %vm1000
      %v1002 = vsel %vm1001, %v993, %v998
      %v1003 = vrsqrt.pop %v867
      %v1004 = vmul.f32 %v1003, %v867
      %v1005 = vmul.f32 %v1004, %v1003
      %v1006 = vmul.f32 0.5, %v1005
      %v1007 = vsub.f32 1.5, %v1006
      %v1008 = vmul.f32 %v1003, %v1007
      %vm1009 = vweird.f32 %v867
      %vm1010 = vweird.f32 %v1003
      %vm1011 = vmor %vm1009, %vm1010
      %v1012 = vsel %vm1011, %v1003, %v1008
      %v1013 = vrsqrt.pop %v868
      %v1014 = vmul.f32 %v1013, %v868
      %v1015 = vmul.f32 %v1014, %v1013
      %v1016 = vmul.f32 0.5, %v1015
      %v1017 = vsub.f32 1.5, %v1016
      %v1018 = vmul.f32 %v1013, %v1017
      %vm1019 = vweird.f32 %v868
      %vm1020 = vweird.f32 %v1013
      %vm1021 = vmor %vm1019, %vm1020
      %v1022 = vsel %vm1021, %v1013, %v1018
      %v1023 = vrsqrt.pop %v869
      %v1024 = vmul.f32 %v1023, %v869
      %v1025 = vmul.f32 %v1024, %v1023
      %v1026 = vmul.f32 0.5, %v1025
      %v1027 = vsub.f32 1.5, %v1026
      %v1028 = vmul.f32 %v1023, %v1027
      %vm1029 = vweird.f32 %v869
      %vm1030 = vweird.f32 %v1023
      %vm1031 = vmor %vm1029, %vm1030
      %v1032 = vsel %vm1031, %v1023, %v1028
      %v1033 = vrsqrt.pop %v870
      %v1034 = vmul.f32 %v1033, %v870
      %v1035 = vmul.f32 %v1034, %v1033
      %v1036 = vmul.f32 0.5, %v1035
      %v1037 = vsub.f32 1.5, %v1036
      %v1038 = vmul.f32 %v1033, %v1037
      %vm1039 = vweird.f32 %v870
      %vm1040 = vweird.f32 %v1033
      %vm1041 = vmor %vm1039, %vm1040
      %v1042 = vsel %vm1041, %v1033, %v1038
      %v1043 = vrsqrt.pop %v871
      %v1044 = vmul.f32 %v1043, %v871
      %v1045 = vmul.f32 %v1044, %v1043
      %v1046 = vmul.f32 0.5, %v1045
      %v1047 = vsub.f32 1.5, %v1046
      %v1048 = vmul.f32 %v1043, %v1047
      %vm1049 = vweird.f32 %v871
      %vm1050 = vweird.f32 %v1043
      %vm1051 = vmor %vm1049, %vm1050
      %v1052 = vsel %vm1051, %v1043, %v1048
      %v1053 = vrsqrt.pop %v872
      %v1054 = vmul.f32 %v1053, %v872
      %v1055 = vmul.f32 %v1054, %v1053
      %v1056 = vmul.f32 0.5, %v1055
      %v1057 = vsub.f32 1.5, %v1056
      %v1058 = vmul.f32 %v1053, %v1057
      %vm1059 = vweird.f32 %v872
      %vm1060 = vweird.f32 %v1053
      %vm1061 = vmor %vm1059, %vm1060
      %v1062 = vsel %vm1061, %v1053, %v1058
      %v1063 = vrsqrt.pop %v873
      %v1064 = vmul.f32 %v1063, %v873
      %v1065 = vmul.f32 %v1064, %v1063
      %v1066 = vmul.f32 0.5, %v1065
      %v1067 = vsub.f32 1.5, %v1066
      %v1068 = vmul.f32 %v1063, %v1067
      %vm1069 = vweird.f32 %v873
      %vm1070 = vweird.f32 %v1063
      %vm1071 = vmor %vm1069, %vm1070
      %v1072 = vsel %vm1071, %v1063, %v1068
      %v1073 = vrsqrt.pop %v874
      %v1074 = vmul.f32 %v1073, %v874
      %v1075 = vmul.f32 %v1074, %v1073
      %v1076 = vmul.f32 0.5, %v1075
      %v1077 = vsub.f32 1.5, %v1076
      %v1078 = vmul.f32 %v1073, %v1077
      %vm1079 = vweird.f32 %v874
      %vm1080 = vweird.f32 %v1073
      %vm1081 = vmor %vm1079, %vm1080
      %v1082 = vsel %vm1081, %v1073, %v1078
      %v1083 = vrsqrt.pop %v875
      %v1084 = vmul.f32 %v1083, %v875
      %v1085 = vmul.f32 %v1084, %v1083
      %v1086 = vmul.f32 0.5, %v1085
      %v1087 = vsub.f32 1.5, %v1086
      %v1088 = vmul.f32 %v1083, %v1087
      %vm1089 = vweird.f32 %v875
      %vm1090 = vweird.f32 %v1083
      %vm1091 = vmor %vm1089, %vm1090
      %v1092 = vsel %vm1091, %v1083, %v1088
      %v1093 = vrsqrt.pop %v876
      %v1094 = vmul.f32 %v1093, %v876
      %v1095 = vmul.f32 %v1094, %v1093
      %v1096 = vmul.f32 0.5, %v1095
      %v1097 = vsub.f32 1.5, %v1096
      %v1098 = vmul.f32 %v1093, %v1097
      %vm1099 = vweird.f32 %v876
      %vm1100 = vweird.f32 %v1093
      %vm1101 = vmor %vm1099, %vm1100
      %v1102 = vsel %vm1101, %v1093, %v1098
      %v1103 = vrsqrt.pop %v877
      %v1104 = vmul.f32 %v1103, %v877
      %v1105 = vmul.f32 %v1104, %v1103
      %v1106 = vmul.f32 0.5, %v1105
      %v1107 = vsub.f32 1.5, %v1106
      %v1108 = vmul.f32 %v1103, %v1107
      %vm1109 = vweird.f32 %v877
      %vm1110 = vweird.f32 %v1103
      %vm1111 = vmor %vm1109, %vm1110
      %v1112 = vsel %vm1111, %v1103, %v1108
      %v1113 = vrsqrt.pop %v878
      %v1114 = vmul.f32 %v1113, %v878
      %v1115 = vmul.f32 %v1114, %v1113
      %v1116 = vmul.f32 0.5, %v1115
      %v1117 = vsub.f32 1.5, %v1116
      %v1118 = vmul.f32 %v1113, %v1117
      %vm1119 = vweird.f32 %v878
      %vm1120 = vweird.f32 %v1113
      %vm1121 = vmor %vm1119, %vm1120
      %v1122 = vsel %vm1121, %v1113, %v1118
      %v1123 = vrsqrt.pop %v879
      %v1124 = vmul.f32 %v1123, %v879
      %v1125 = vmul.f32 %v1124, %v1123
      %v1126 = vmul.f32 0.5, %v1125
      %v1127 = vsub.f32 1.5, %v1126
      %v1128 = vmul.f32 %v1123, %v1127
      %vm1129 = vweird.f32 %v879
      %vm1130 = vweird.f32 %v1123
      %vm1131 = vmor %vm1129, %vm1130
      %v1132 = vsel %vm1131, %v1123, %v1128
      %v1133 = vrsqrt.pop %v880
      %v1134 = vmul.f32 %v1133, %v880
      %v1135 = vmul.f32 %v1134, %v1133
      %v1136 = vmul.f32 0.5, %v1135
      %v1137 = vsub.f32 1.5, %v1136
      %v1138 = vmul.f32 %v1133, %v1137
      %vm1139 = vweird.f32 %v880
      %vm1140 = vweird.f32 %v1133
      %vm1141 = vmor %vm1139, %vm1140
      %v1142 = vsel %vm1141, %v1133, %v1138
      %v1143 = vrsqrt.pop %v881
      %v1144 = vmul.f32 %v1143, %v881
      %v1145 = vmul.f32 %v1144, %v1143
      %v1146 = vmul.f32 0.5, %v1145
      %v1147 = vsub.f32 1.5, %v1146
      %v1148 = vmul.f32 %v1143, %v1147
      %vm1149 = vweird.f32 %v881
      %vm1150 = vweird.f32 %v1143
      %vm1151 = vmor %vm1149, %vm1150
      %v1152 = vsel %vm1151, %v1143, %v1148
      %v1153 = vrsqrt.pop %v882
      %v1154 = vmul.f32 %v1153, %v882
      %v1155 = vmul.f32 %v1154, %v1153
      %v1156 = vmul.f32 0.5, %v1155
      %v1157 = vsub.f32 1.5, %v1156
      %v1158 = vmul.f32 %v1153, %v1157
      %vm1159 = vweird.f32 %v882
      %vm1160 = vweird.f32 %v1153
      %vm1161 = vmor %vm1159, %vm1160
      %v1162 = vsel %vm1161, %v1153, %v1158
      %v1163 = vrsqrt.pop %v883
      %v1164 = vmul.f32 %v1163, %v883
      %v1165 = vmul.f32 %v1164, %v1163
      %v1166 = vmul.f32 0.5, %v1165
      %v1167 = vsub.f32 1.5, %v1166
      %v1168 = vmul.f32 %v1163, %v1167
      %vm1169 = vweird.f32 %v883
      %vm1170 = vweird.f32 %v1163
      %vm1171 = vmor %vm1169, %vm1170
      %v1172 = vsel %vm1171, %v1163, %v1168
      %v1173 = vrsqrt.pop %v884
      %v1174 = vmul.f32 %v1173, %v884
      %v1175 = vmul.f32 %v1174, %v1173
      %v1176 = vmul.f32 0.5, %v1175
      %v1177 = vsub.f32 1.5, %v1176
      %v1178 = vmul.f32 %v1173, %v1177
      %vm1179 = vweird.f32 %v884
      %vm1180 = vweird.f32 %v1173
      %vm1181 = vmor %vm1179, %vm1180
      %v1182 = vsel %vm1181, %v1173, %v1178
      %v1183 = vrsqrt.pop %v885
      %v1184 = vmul.f32 %v1183, %v885
      %v1185 = vmul.f32 %v1184, %v1183
      %v1186 = vmul.f32 0.5, %v1185
      %v1187 = vsub.f32 1.5, %v1186
      %v1188 = vmul.f32 %v1183, %v1187
      %vm1189 = vweird.f32 %v885
      %vm1190 = vweird.f32 %v1183
      %vm1191 = vmor %vm1189, %vm1190
      %v1192 = vsel %vm1191, %v1183, %v1188
      %v1193 = vrsqrt.pop %v886
      %v1194 = vmul.f32 %v1193, %v886
      %v1195 = vmul.f32 %v1194, %v1193
      %v1196 = vmul.f32 0.5, %v1195
      %v1197 = vsub.f32 1.5, %v1196
      %v1198 = vmul.f32 %v1193, %v1197
      %vm1199 = vweird.f32 %v886
      %vm1200 = vweird.f32 %v1193
      %vm1201 = vmor %vm1199, %vm1200
      %v1202 = vsel %vm1201, %v1193, %v1198
      %v1203 = vrsqrt.pop %v887
      %v1204 = vmul.f32 %v1203, %v887
      %v1205 = vmul.f32 %v1204, %v1203
      %v1206 = vmul.f32 0.5, %v1205
      %v1207 = vsub.f32 1.5, %v1206
      %v1208 = vmul.f32 %v1203, %v1207
      %vm1209 = vweird.f32 %v887
      %vm1210 = vweird.f32 %v1203
      %vm1211 = vmor %vm1209, %vm1210
      %v1212 = vsel %vm1211, %v1203, %v1208
      %v1213 = vrsqrt.pop %v888
      %v1214 = vmul.f32 %v1213, %v888
      %v1215 = vmul.f32 %v1214, %v1213
      %v1216 = vmul.f32 0.5, %v1215
      %v1217 = vsub.f32 1.5, %v1216
      %v1218 = vmul.f32 %v1213, %v1217
      %vm1219 = vweird.f32 %v888
      %vm1220 = vweird.f32 %v1213
      %vm1221 = vmor %vm1219, %vm1220
      %v1222 = vsel %vm1221, %v1213, %v1218
      %v1223 = vrsqrt.pop %v889
      %v1224 = vmul.f32 %v1223, %v889
      %v1225 = vmul.f32 %v1224, %v1223
      %v1226 = vmul.f32 0.5, %v1225
      %v1227 = vsub.f32 1.5, %v1226
      %v1228 = vmul.f32 %v1223, %v1227
      %vm1229 = vweird.f32 %v889
      %vm1230 = vweird.f32 %v1223
      %vm1231 = vmor %vm1229, %vm1230
      %v1232 = vsel %vm1231, %v1223, %v1228
      %v1233 = vrsqrt.pop %v890
      %v1234 = vmul.f32 %v1233, %v890
      %v1235 = vmul.f32 %v1234, %v1233
      %v1236 = vmul.f32 0.5, %v1235
      %v1237 = vsub.f32 1.5, %v1236
      %v1238 = vmul.f32 %v1233, %v1237
      %vm1239 = vweird.f32 %v890
      %vm1240 = vweird.f32 %v1233
      %vm1241 = vmor %vm1239, %vm1240
      %v1242 = vsel %vm1241, %v1233, %v1238
      %v1243 = vrsqrt.pop %v891
      %v1244 = vmul.f32 %v1243, %v891
      %v1245 = vmul.f32 %v1244, %v1243
      %v1246 = vmul.f32 0.5, %v1245
      %v1247 = vsub.f32 1.5, %v1246
      %v1248 = vmul.f32 %v1243, %v1247
      %vm1249 = vweird.f32 %v891
      %vm1250 = vweird.f32 %v1243
      %vm1251 = vmor %vm1249, %vm1250
      %v1252 = vsel %vm1251, %v1243, %v1248
      %v1253 = vrsqrt.pop %v892
      %v1254 = vmul.f32 %v1253, %v892
      %v1255 = vmul.f32 %v1254, %v1253
      %v1256 = vmul.f32 0.5, %v1255
      %v1257 = vsub.f32 1.5, %v1256
      %v1258 = vmul.f32 %v1253, %v1257
      %vm1259 = vweird.f32 %v892
      %vm1260 = vweird.f32 %v1253
      %vm1261 = vmor %vm1259, %vm1260
      %v1262 = vsel %vm1261, %v1253, %v1258
      %v1263 = vrsqrt.pop %v893
      %v1264 = vmul.f32 %v1263, %v893
      %v1265 = vmul.f32 %v1264, %v1263
      %v1266 = vmul.f32 0.5, %v1265
      %v1267 = vsub.f32 1.5, %v1266
      %v1268 = vmul.f32 %v1263, %v1267
      %vm1269 = vweird.f32 %v893
      %vm1270 = vweird.f32 %v1263
      %vm1271 = vmor %vm1269, %vm1270
      %v1272 = vsel %vm1271, %v1263, %v1268
      %v1273 = vrsqrt.pop %v894
      %v1274 = vmul.f32 %v1273, %v894
      %v1275 = vmul.f32 %v1274, %v1273
      %v1276 = vmul.f32 0.5, %v1275
      %v1277 = vsub.f32 1.5, %v1276
      %v1278 = vmul.f32 %v1273, %v1277
      %vm1279 = vweird.f32 %v894
      %vm1280 = vweird.f32 %v1273
      %vm1281 = vmor %vm1279, %vm1280
      %v1282 = vsel %vm1281, %v1273, %v1278
      %v1283 = vrsqrt.pop %v895
      %v1284 = vmul.f32 %v1283, %v895
      %v1285 = vmul.f32 %v1284, %v1283
      %v1286 = vmul.f32 0.5, %v1285
      %v1287 = vsub.f32 1.5, %v1286
      %v1288 = vmul.f32 %v1283, %v1287
      %vm1289 = vweird.f32 %v895
      %vm1290 = vweird.f32 %v1283
      %vm1291 = vmor %vm1289, %vm1290
      %v1292 = vsel %vm1291, %v1283, %v1288
      %v1293 = vrsqrt.pop %v896
      %v1294 = vmul.f32 %v1293, %v896
      %v1295 = vmul.f32 %v1294, %v1293
      %v1296 = vmul.f32 0.5, %v1295
      %v1297 = vsub.f32 1.5, %v1296
      %v1298 = vmul.f32 %v1293, %v1297
      %vm1299 = vweird.f32 %v896
      %vm1300 = vweird.f32 %v1293
      %vm1301 = vmor %vm1299, %vm1300
      %v1302 = vsel %vm1301, %v1293, %v1298
      %v1303 = vrsqrt.pop %v897
      %v1304 = vmul.f32 %v1303, %v897
      %v1305 = vmul.f32 %v1304, %v1303
      %v1306 = vmul.f32 0.5, %v1305
      %v1307 = vsub.f32 1.5, %v1306
      %v1308 = vmul.f32 %v1303, %v1307
      %vm1309 = vweird.f32 %v897
      %vm1310 = vweird.f32 %v1303
      %vm1311 = vmor %vm1309, %vm1310
      %v1312 = vsel %vm1311, %v1303, %v1308
      %v1313 = vrsqrt.pop %v898
      %v1314 = vmul.f32 %v1313, %v898
      %v1315 = vmul.f32 %v1314, %v1313
      %v1316 = vmul.f32 0.5, %v1315
      %v1317 = vsub.f32 1.5, %v1316
      %v1318 = vmul.f32 %v1313, %v1317
      %vm1319 = vweird.f32 %v898
      %vm1320 = vweird.f32 %v1313
      %vm1321 = vmor %vm1319, %vm1320
      %v1322 = vsel %vm1321, %v1313, %v1318
      %v1323 = vrsqrt.pop %v899
      %v1324 = vmul.f32 %v1323, %v899
      %v1325 = vmul.f32 %v1324, %v1323
      %v1326 = vmul.f32 0.5, %v1325
      %v1327 = vsub.f32 1.5, %v1326
      %v1328 = vmul.f32 %v1323, %v1327
      %vm1329 = vweird.f32 %v899
      %vm1330 = vweird.f32 %v1323
      %vm1331 = vmor %vm1329, %vm1330
      %v1332 = vsel %vm1331, %v1323, %v1328
      %v1333 = vrsqrt.pop %v900
      %v1334 = vmul.f32 %v1333, %v900
      %v1335 = vmul.f32 %v1334, %v1333
      %v1336 = vmul.f32 0.5, %v1335
      %v1337 = vsub.f32 1.5, %v1336
      %v1338 = vmul.f32 %v1333, %v1337
      %vm1339 = vweird.f32 %v900
      %vm1340 = vweird.f32 %v1333
      %vm1341 = vmor %vm1339, %vm1340
      %v1342 = vsel %vm1341, %v1333, %v1338
      %v1343 = vrsqrt.pop %v901
      %v1344 = vmul.f32 %v1343, %v901
      %v1345 = vmul.f32 %v1344, %v1343
      %v1346 = vmul.f32 0.5, %v1345
      %v1347 = vsub.f32 1.5, %v1346
      %v1348 = vmul.f32 %v1343, %v1347
      %vm1349 = vweird.f32 %v901
      %vm1350 = vweird.f32 %v1343
      %vm1351 = vmor %vm1349, %vm1350
      %v1352 = vsel %vm1351, %v1343, %v1348
      %v1353 = vrsqrt.pop %v902
      %v1354 = vmul.f32 %v1353, %v902
      %v1355 = vmul.f32 %v1354, %v1353
      %v1356 = vmul.f32 0.5, %v1355
      %v1357 = vsub.f32 1.5, %v1356
      %v1358 = vmul.f32 %v1353, %v1357
      %vm1359 = vweird.f32 %v902
      %vm1360 = vweird.f32 %v1353
      %vm1361 = vmor %vm1359, %vm1360
      %v1362 = vsel %vm1361, %v1353, %v1358
      %v1363 = vrsqrt.pop %v903
      %v1364 = vmul.f32 %v1363, %v903
      %v1365 = vmul.f32 %v1364, %v1363
      %v1366 = vmul.f32 0.5, %v1365
      %v1367 = vsub.f32 1.5, %v1366
      %v1368 = vmul.f32 %v1363, %v1367
      %vm1369 = vweird.f32 %v903
      %vm1370 = vweird.f32 %v1363
      %vm1371 = vmor %vm1369, %vm1370
      %v1372 = vsel %vm1371, %v1363, %v1368
      %v1373 = vrsqrt.pop %v904
      %v1374 = vmul.f32 %v1373, %v904
      %v1375 = vmul.f32 %v1374, %v1373
      %v1376 = vmul.f32 0.5, %v1375
      %v1377 = vsub.f32 1.5, %v1376
      %v1378 = vmul.f32 %v1373, %v1377
      %vm1379 = vweird.f32 %v904
      %vm1380 = vweird.f32 %v1373
      %vm1381 = vmor %vm1379, %vm1380
      %v1382 = vsel %vm1381, %v1373, %v1378
      %v1383 = vrsqrt.pop %v905
      %v1384 = vmul.f32 %v1383, %v905
      %v1385 = vmul.f32 %v1384, %v1383
      %v1386 = vmul.f32 0.5, %v1385
      %v1387 = vsub.f32 1.5, %v1386
      %v1388 = vmul.f32 %v1383, %v1387
      %vm1389 = vweird.f32 %v905
      %vm1390 = vweird.f32 %v1383
      %vm1391 = vmor %vm1389, %vm1390
      %v1392 = vsel %vm1391, %v1383, %v1388
      %v1393 = vrsqrt.pop %v906
      %v1394 = vmul.f32 %v1393, %v906
      %v1395 = vmul.f32 %v1394, %v1393
      %v1396 = vmul.f32 0.5, %v1395
      %v1397 = vsub.f32 1.5, %v1396
      %v1398 = vmul.f32 %v1393, %v1397
      %vm1399 = vweird.f32 %v906
      %vm1400 = vweird.f32 %v1393
      %vm1401 = vmor %vm1399, %vm1400
      %v1402 = vsel %vm1401, %v1393, %v1398
      %v1403 = vrsqrt.pop %v907
      %v1404 = vmul.f32 %v1403, %v907
      %v1405 = vmul.f32 %v1404, %v1403
      %v1406 = vmul.f32 0.5, %v1405
      %v1407 = vsub.f32 1.5, %v1406
      %v1408 = vmul.f32 %v1403, %v1407
      %vm1409 = vweird.f32 %v907
      %vm1410 = vweird.f32 %v1403
      %vm1411 = vmor %vm1409, %vm1410
      %v1412 = vsel %vm1411, %v1403, %v1408
      %v1413 = vrsqrt.pop %v908
      %v1414 = vmul.f32 %v1413, %v908
      %v1415 = vmul.f32 %v1414, %v1413
      %v1416 = vmul.f32 0.5, %v1415
      %v1417 = vsub.f32 1.5, %v1416
      %v1418 = vmul.f32 %v1413, %v1417
      %vm1419 = vweird.f32 %v908
      %vm1420 = vweird.f32 %v1413
      %vm1421 = vmor %vm1419, %vm1420
      %v1422 = vsel %vm1421, %v1413, %v1418
      %v1423 = vrsqrt.pop %v909
      %v1424 = vmul.f32 %v1423, %v909
      %v1425 = vmul.f32 %v1424, %v1423
      %v1426 = vmul.f32 0.5, %v1425
      %v1427 = vsub.f32 1.5, %v1426
      %v1428 = vmul.f32 %v1423, %v1427
      %vm1429 = vweird.f32 %v909
      %vm1430 = vweird.f32 %v1423
      %vm1431 = vmor %vm1429, %vm1430
      %v1432 = vsel %vm1431, %v1423, %v1428
      %v1433 = vrsqrt.pop %v910
      %v1434 = vmul.f32 %v1433, %v910
      %v1435 = vmul.f32 %v1434, %v1433
      %v1436 = vmul.f32 0.5, %v1435
      %v1437 = vsub.f32 1.5, %v1436
      %v1438 = vmul.f32 %v1433, %v1437
      %vm1439 = vweird.f32 %v910
      %vm1440 = vweird.f32 %v1433
      %vm1441 = vmor %vm1439, %vm1440
      %v1442 = vsel %vm1441, %v1433, %v1438
      %v1443 = vrsqrt.pop %v911
      %v1444 = vmul.f32 %v1443, %v911
      %v1445 = vmul.f32 %v1444, %v1443
      %v1446 = vmul.f32 0.5, %v1445
      %v1447 = vsub.f32 1.5, %v1446
      %v1448 = vmul.f32 %v1443, %v1447
      %vm1449 = vweird.f32 %v911
      %vm1450 = vweird.f32 %v1443
      %vm1451 = vmor %vm1449, %vm1450
      %v1452 = vsel %vm1451, %v1443, %v1448
      %v1453 = vrsqrt.pop %v912
      %v1454 = vmul.f32 %v1453, %v912
      %v1455 = vmul.f32 %v1454, %v1453
      %v1456 = vmul.f32 0.5, %v1455
      %v1457 = vsub.f32 1.5, %v1456
      %v1458 = vmul.f32 %v1453, %v1457
      %vm1459 = vweird.f32 %v912
      %vm1460 = vweird.f32 %v1453
      %vm1461 = vmor %vm1459, %vm1460
      %v1462 = vsel %vm1461, %v1453, %v1458
      %v1463 = vrsqrt.pop %v913
      %v1464 = vmul.f32 %v1463, %v913
      %v1465 = vmul.f32 %v1464, %v1463
      %v1466 = vmul.f32 0.5, %v1465
      %v1467 = vsub.f32 1.5, %v1466
      %v1468 = vmul.f32 %v1463, %v1467
      %vm1469 = vweird.f32 %v913
      %vm1470 = vweird.f32 %v1463
      %vm1471 = vmor %vm1469, %vm1470
      %v1472 = vsel %vm1471, %v1463, %v1468
      %v1473 = vrsqrt.pop %v914
      %v1474 = vmul.f32 %v1473, %v914
      %v1475 = vmul.f32 %v1474, %v1473
      %v1476 = vmul.f32 0.5, %v1475
      %v1477 = vsub.f32 1.5, %v1476
      %v1478 = vmul.f32 %v1473, %v1477
      %vm1479 = vweird.f32 %v914
      %vm1480 = vweird.f32 %v1473
      %vm1481 = vmor %vm1479, %vm1480
      %v1482 = vsel %vm1481, %v1473, %v1478
      %v1483 = vrsqrt.pop %v915
      %v1484 = vmul.f32 %v1483, %v915
      %v1485 = vmul.f32 %v1484, %v1483
      %v1486 = vmul.f32 0.5, %v1485
      %v1487 = vsub.f32 1.5, %v1486
      %v1488 = vmul.f32 %v1483, %v1487
      %vm1489 = vweird.f32 %v915
      %vm1490 = vweird.f32 %v1483
      %vm1491 = vmor %vm1489, %vm1490
      %v1492 = vsel %vm1491, %v1483, %v1488
      %v1493 = vrsqrt.pop %v916
      %v1494 = vmul.f32 %v1493, %v916
      %v1495 = vmul.f32 %v1494, %v1493
      %v1496 = vmul.f32 0.5, %v1495
      %v1497 = vsub.f32 1.5, %v1496
      %v1498 = vmul.f32 %v1493, %v1497
      %vm1499 = vweird.f32 %v916
      %vm1500 = vweird.f32 %v1493
      %vm1501 = vmor %vm1499, %vm1500
      %v1502 = vsel %vm1501, %v1493, %v1498
      %v1503 = vrsqrt.pop %v917
      %v1504 = vmul.f32 %v1503, %v917
      %v1505 = vmul.f32 %v1504, %v1503
      %v1506 = vmul.f32 0.5, %v1505
      %v1507 = vsub.f32 1.5, %v1506
      %v1508 = vmul.f32 %v1503, %v1507
      %vm1509 = vweird.f32 %v917
      %vm1510 = vweird.f32 %v1503
      %vm1511 = vmor %vm1509, %vm1510
      %v1512 = vsel %vm1511, %v1503, %v1508
      %v1513 = vrsqrt.pop %v918
      %v1514 = vmul.f32 %v1513, %v918
      %v1515 = vmul.f32 %v1514, %v1513
      %v1516 = vmul.f32 0.5, %v1515
      %v1517 = vsub.f32 1.5, %v1516
      %v1518 = vmul.f32 %v1513, %v1517
      %vm1519 = vweird.f32 %v918
      %vm1520 = vweird.f32 %v1513
      %vm1521 = vmor %vm1519, %vm1520
      %v1522 = vsel %vm1521, %v1513, %v1518
      %v1523 = vrsqrt.pop %v919
      %v1524 = vmul.f32 %v1523, %v919
      %v1525 = vmul.f32 %v1524, %v1523
      %v1526 = vmul.f32 0.5, %v1525
      %v1527 = vsub.f32 1.5, %v1526
      %v1528 = vmul.f32 %v1523, %v1527
      %vm1529 = vweird.f32 %v919
      %vm1530 = vweird.f32 %v1523
      %vm1531 = vmor %vm1529, %vm1530
      %v1532 = vsel %vm1531, %v1523, %v1528
      %v1533 = vrsqrt.pop %v920
      %v1534 = vmul.f32 %v1533, %v920
      %v1535 = vmul.f32 %v1534, %v1533
      %v1536 = vmul.f32 0.5, %v1535
      %v1537 = vsub.f32 1.5, %v1536
      %v1538 = vmul.f32 %v1533, %v1537
      %vm1539 = vweird.f32 %v920
      %vm1540 = vweird.f32 %v1533
      %vm1541 = vmor %vm1539, %vm1540
      %v1542 = vsel %vm1541, %v1533, %v1538
      %v1543 = vrsqrt.pop %v921
      %v1544 = vmul.f32 %v1543, %v921
      %v1545 = vmul.f32 %v1544, %v1543
      %v1546 = vmul.f32 0.5, %v1545
      %v1547 = vsub.f32 1.5, %v1546
      %v1548 = vmul.f32 %v1543, %v1547
      %vm1549 = vweird.f32 %v921
      %vm1550 = vweird.f32 %v1543
      %vm1551 = vmor %vm1549, %vm1550
      %v1552 = vsel %vm1551, %v1543, %v1548
      %v1553 = vrsqrt.pop %v922
      %v1554 = vmul.f32 %v1553, %v922
      %v1555 = vmul.f32 %v1554, %v1553
      %v1556 = vmul.f32 0.5, %v1555
      %v1557 = vsub.f32 1.5, %v1556
      %v1558 = vmul.f32 %v1553, %v1557
      %vm1559 = vweird.f32 %v922
      %vm1560 = vweird.f32 %v1553
      %vm1561 = vmor %vm1559, %vm1560
      %v1562 = vsel %vm1561, %v1553, %v1558
      %v1563 = vld [vmem:[%s1] sm:$0x1]
      %v1564 = vmul.f32 %v147, %v932
      %v1565 = vmul.f32 %v148, %v942
      %v1566 = vmul.f32 %v149, %v952
      %v1567 = vmul.f32 %v150, %v962
      %v1568 = vmul.f32 %v151, %v972
      %v1569 = vmul.f32 %v152, %v982
      %v1570 = vmul.f32 %v153, %v992
      %v1571 = vmul.f32 %v154, %v1002
      %v1572 = vmul.f32 %v155, %v1012
      %v1573 = vmul.f32 %v156, %v1022
      %v1574 = vmul.f32 %v157, %v1032
      %v1575 = vmul.f32 %v158, %v1042
      %v1576 = vmul.f32 %v159, %v1052
      %v1577 = vmul.f32 %v160, %v1062
      %v1578 = vmul.f32 %v161, %v1072
      %v1579 = vmul.f32 %v162, %v1082
      %v1580 = vmul.f32 %v163, %v1092
      %v1581 = vmul.f32 %v164, %v1102
      %v1582 = vmul.f32 %v165, %v1112
      %v1583 = vmul.f32 %v166, %v1122
      %v1584 = vmul.f32 %v167, %v1132
      %v1585 = vmul.f32 %v168, %v1142
      %v1586 = vmul.f32 %v169, %v1152
      %v1587 = vmul.f32 %v170, %v1162
      %v1588 = vmul.f32 %v171, %v1172
      %v1589 = vmul.f32 %v172, %v1182
      %v1590 = vmul.f32 %v173, %v1192
      %v1591 = vmul.f32 %v174, %v1202
      %v1592 = vmul.f32 %v175, %v1212
      %v1593 = vmul.f32 %v176, %v1222
      %v1594 = vmul.f32 %v177, %v1232
      %v1595 = vmul.f32 %v178, %v1242
      %v1596 = vmul.f32 %v179, %v1252
      %v1597 = vmul.f32 %v180, %v1262
      %v1598 = vmul.f32 %v181, %v1272
      %v1599 = vmul.f32 %v182, %v1282
      %v1600 = vmul.f32 %v183, %v1292
      %v1601 = vmul.f32 %v184, %v1302
      %v1602 = vmul.f32 %v185, %v1312
      %v1603 = vmul.f32 %v186, %v1322
      %v1604 = vmul.f32 %v187, %v1332
      %v1605 = vmul.f32 %v188, %v1342
      %v1606 = vmul.f32 %v189, %v1352
      %v1607 = vmul.f32 %v190, %v1362
      %v1608 = vmul.f32 %v191, %v1372
      %v1609 = vmul.f32 %v192, %v1382
      %v1610 = vmul.f32 %v193, %v1392
      %v1611 = vmul.f32 %v194, %v1402
      %v1612 = vmul.f32 %v195, %v1412
      %v1613 = vmul.f32 %v196, %v1422
      %v1614 = vmul.f32 %v197, %v1432
      %v1615 = vmul.f32 %v198, %v1442
      %v1616 = vmul.f32 %v199, %v1452
      %v1617 = vmul.f32 %v200, %v1462
      %v1618 = vmul.f32 %v201, %v1472
      %v1619 = vmul.f32 %v202, %v1482
      %v1620 = vmul.f32 %v203, %v1492
      %v1621 = vmul.f32 %v204, %v1502
      %v1622 = vmul.f32 %v205, %v1512
      %v1623 = vmul.f32 %v206, %v1522
      %v1624 = vmul.f32 %v207, %v1532
      %v1625 = vmul.f32 %v208, %v1542
      %v1626 = vmul.f32 %v209, %v1552
      %v1627 = vmul.f32 %v210, %v1562
      %v1629 = vperm.slane %v1563, 0
      %v1631 = vmul.f32 %v1564, %v1629
      %v1632 = vmul.f32 %v1565, %v1629
      %v1633 = vmul.f32 %v1566, %v1629
      %v1634 = vmul.f32 %v1567, %v1629
      %v1635 = vmul.f32 %v1568, %v1629
      %v1636 = vmul.f32 %v1569, %v1629
      %v1637 = vmul.f32 %v1570, %v1629
      %v1638 = vmul.f32 %v1571, %v1629
      %v1639 = vmul.f32 %v1572, %v1629
      %v1640 = vmul.f32 %v1573, %v1629
      %v1641 = vmul.f32 %v1574, %v1629
      %v1642 = vmul.f32 %v1575, %v1629
      %v1643 = vmul.f32 %v1576, %v1629
      %v1644 = vmul.f32 %v1577, %v1629
      %v1645 = vmul.f32 %v1578, %v1629
      %v1646 = vmul.f32 %v1579, %v1629
      %v1647 = vmul.f32 %v1580, %v1629
      %v1648 = vmul.f32 %v1581, %v1629
      %v1649 = vmul.f32 %v1582, %v1629
      %v1650 = vmul.f32 %v1583, %v1629
      %v1651 = vmul.f32 %v1584, %v1629
      %v1652 = vmul.f32 %v1585, %v1629
      %v1653 = vmul.f32 %v1586, %v1629
      %v1654 = vmul.f32 %v1587, %v1629
      %v1655 = vmul.f32 %v1588, %v1629
      %v1656 = vmul.f32 %v1589, %v1629
      %v1657 = vmul.f32 %v1590, %v1629
      %v1658 = vmul.f32 %v1591, %v1629
      %v1659 = vmul.f32 %v1592, %v1629
      %v1660 = vmul.f32 %v1593, %v1629
      %v1661 = vmul.f32 %v1594, %v1629
      %v1662 = vmul.f32 %v1595, %v1629
      %v1663 = vmul.f32 %v1596, %v1629
      %v1664 = vmul.f32 %v1597, %v1629
      %v1665 = vmul.f32 %v1598, %v1629
      %v1666 = vmul.f32 %v1599, %v1629
      %v1667 = vmul.f32 %v1600, %v1629
      %v1668 = vmul.f32 %v1601, %v1629
      %v1669 = vmul.f32 %v1602, %v1629
      %v1670 = vmul.f32 %v1603, %v1629
      %v1671 = vmul.f32 %v1604, %v1629
      %v1672 = vmul.f32 %v1605, %v1629
      %v1673 = vmul.f32 %v1606, %v1629
      %v1674 = vmul.f32 %v1607, %v1629
      %v1675 = vmul.f32 %v1608, %v1629
      %v1676 = vmul.f32 %v1609, %v1629
      %v1677 = vmul.f32 %v1610, %v1629
      %v1678 = vmul.f32 %v1611, %v1629
      %v1679 = vmul.f32 %v1612, %v1629
      %v1680 = vmul.f32 %v1613, %v1629
      %v1681 = vmul.f32 %v1614, %v1629
      %v1682 = vmul.f32 %v1615, %v1629
      %v1683 = vmul.f32 %v1616, %v1629
      %v1684 = vmul.f32 %v1617, %v1629
      %v1685 = vmul.f32 %v1618, %v1629
      %v1686 = vmul.f32 %v1619, %v1629
      %v1687 = vmul.f32 %v1620, %v1629
      %v1688 = vmul.f32 %v1621, %v1629
      %v1689 = vmul.f32 %v1622, %v1629
      %v1690 = vmul.f32 %v1623, %v1629
      %v1691 = vmul.f32 %v1624, %v1629
      %v1692 = vmul.f32 %v1625, %v1629
      %v1693 = vmul.f32 %v1626, %v1629
      %v1694 = vmul.f32 %v1627, %v1629
      %1695 = vst.msk [vmem:[%s145] sm:$0xff] %vm211, %v1631
      %1696 = vst.msk [vmem:[%s145 + $0x8] sm:$0xff] %vm211, %v1632
      %1697 = vst.msk [vmem:[%s145 + $0x10] sm:$0xff] %vm211, %v1633
      %1698 = vst.msk [vmem:[%s145 + $0x18] sm:$0xff] %vm211, %v1634
      %1699 = vst.msk [vmem:[%s145 + $0x20] sm:$0xff] %vm211, %v1635
      %1700 = vst.msk [vmem:[%s145 + $0x28] sm:$0xff] %vm211, %v1636
      %1701 = vst.msk [vmem:[%s145 + $0x30] sm:$0xff] %vm211, %v1637
      %1702 = vst.msk [vmem:[%s145 + $0x38] sm:$0xff] %vm211, %v1638
      %1703 = vst.msk [vmem:[%s145 + $0x40] sm:$0xff] %vm211, %v1639
      %1704 = vst.msk [vmem:[%s145 + $0x48] sm:$0xff] %vm211, %v1640
      %1705 = vst.msk [vmem:[%s145 + $0x50] sm:$0xff] %vm211, %v1641
      %1706 = vst.msk [vmem:[%s145 + $0x58] sm:$0xff] %vm211, %v1642
      %1707 = vst.msk [vmem:[%s145 + $0x60] sm:$0xff] %vm211, %v1643
      %1708 = vst.msk [vmem:[%s145 + $0x68] sm:$0xff] %vm211, %v1644
      %1709 = vst.msk [vmem:[%s145 + $0x70] sm:$0xff] %vm211, %v1645
      %1710 = vst.msk [vmem:[%s145 + $0x78] sm:$0xff] %vm211, %v1646
      %1711 = vst.msk [vmem:[%s145 + $0x80] sm:$0xff] %vm211, %v1647
      %1712 = vst.msk [vmem:[%s145 + $0x88] sm:$0xff] %vm211, %v1648
      %1713 = vst.msk [vmem:[%s145 + $0x90] sm:$0xff] %vm211, %v1649
      %1714 = vst.msk [vmem:[%s145 + $0x98] sm:$0xff] %vm211, %v1650
      %1715 = vst.msk [vmem:[%s145 + $0xa0] sm:$0xff] %vm211, %v1651
      %1716 = vst.msk [vmem:[%s145 + $0xa8] sm:$0xff] %vm211, %v1652
      %1717 = vst.msk [vmem:[%s145 + $0xb0] sm:$0xff] %vm211, %v1653
      %1718 = vst.msk [vmem:[%s145 + $0xb8] sm:$0xff] %vm211, %v1654
      %1719 = vst.msk [vmem:[%s145 + $0xc0] sm:$0xff] %vm211, %v1655
      %1720 = vst.msk [vmem:[%s145 + $0xc8] sm:$0xff] %vm211, %v1656
      %1721 = vst.msk [vmem:[%s145 + $0xd0] sm:$0xff] %vm211, %v1657
      %1722 = vst.msk [vmem:[%s145 + $0xd8] sm:$0xff] %vm211, %v1658
      %1723 = vst.msk [vmem:[%s145 + $0xe0] sm:$0xff] %vm211, %v1659
      %1724 = vst.msk [vmem:[%s145 + $0xe8] sm:$0xff] %vm211, %v1660
      %1725 = vst.msk [vmem:[%s145 + $0xf0] sm:$0xff] %vm211, %v1661
      %1726 = vst.msk [vmem:[%s145 + $0xf8] sm:$0xff] %vm211, %v1662
      %1727 = vst.msk [vmem:[%s145 + $0x100] sm:$0xff] %vm211, %v1663
      %1728 = vst.msk [vmem:[%s145 + $0x108] sm:$0xff] %vm211, %v1664
      %1729 = vst.msk [vmem:[%s145 + $0x110] sm:$0xff] %vm211, %v1665
      %1730 = vst.msk [vmem:[%s145 + $0x118] sm:$0xff] %vm211, %v1666
      %1731 = vst.msk [vmem:[%s145 + $0x120] sm:$0xff] %vm211, %v1667
      %1732 = vst.msk [vmem:[%s145 + $0x128] sm:$0xff] %vm211, %v1668
      %1733 = vst.msk [vmem:[%s145 + $0x130] sm:$0xff] %vm211, %v1669
      %1734 = vst.msk [vmem:[%s145 + $0x138] sm:$0xff] %vm211, %v1670
      %1735 = vst.msk [vmem:[%s145 + $0x140] sm:$0xff] %vm211, %v1671
      %1736 = vst.msk [vmem:[%s145 + $0x148] sm:$0xff] %vm211, %v1672
      %1737 = vst.msk [vmem:[%s145 + $0x150] sm:$0xff] %vm211, %v1673
      %1738 = vst.msk [vmem:[%s145 + $0x158] sm:$0xff] %vm211, %v1674
      %1739 = vst.msk [vmem:[%s145 + $0x160] sm:$0xff] %vm211, %v1675
      %1740 = vst.msk [vmem:[%s145 + $0x168] sm:$0xff] %vm211, %v1676
      %1741 = vst.msk [vmem:[%s145 + $0x170] sm:$0xff] %vm211, %v1677
      %1742 = vst.msk [vmem:[%s145 + $0x178] sm:$0xff] %vm211, %v1678
      %1743 = vst.msk [vmem:[%s145 + $0x180] sm:$0xff] %vm211, %v1679
      %1744 = vst.msk [vmem:[%s145 + $0x188] sm:$0xff] %vm211, %v1680
      %1745 = vst.msk [vmem:[%s145 + $0x190] sm:$0xff] %vm211, %v1681
      %1746 = vst.msk [vmem:[%s145 + $0x198] sm:$0xff] %vm211, %v1682
      %1747 = vst.msk [vmem:[%s145 + $0x1a0] sm:$0xff] %vm211, %v1683
      %1748 = vst.msk [vmem:[%s145 + $0x1a8] sm:$0xff] %vm211, %v1684
      %1749 = vst.msk [vmem:[%s145 + $0x1b0] sm:$0xff] %vm211, %v1685
      %1750 = vst.msk [vmem:[%s145 + $0x1b8] sm:$0xff] %vm211, %v1686
      %1751 = vst.msk [vmem:[%s145 + $0x1c0] sm:$0xff] %vm211, %v1687
      %1752 = vst.msk [vmem:[%s145 + $0x1c8] sm:$0xff] %vm211, %v1688
      %1753 = vst.msk [vmem:[%s145 + $0x1d0] sm:$0xff] %vm211, %v1689
      %1754 = vst.msk [vmem:[%s145 + $0x1d8] sm:$0xff] %vm211, %v1690
      %1755 = vst.msk [vmem:[%s145 + $0x1e0] sm:$0xff] %vm211, %v1691
      %1756 = vst.msk [vmem:[%s145 + $0x1e8] sm:$0xff] %vm211, %v1692
      %1757 = vst.msk [vmem:[%s145 + $0x1f0] sm:$0xff] %vm211, %v1693
      %1758 = vst.msk [vmem:[%s145 + $0x1f8] sm:$0xff] %vm211, %v1694
      %s1759 = smul.u32 64, %s13
      %p1760 = scmp.lt.s32.totalorder %s1759, 127
      %s1761 = scalar_select %p1760, %s1759, 127
      %s1762 = smul.addr %s1761, 8
      %s1763 = scalar_lea.vmem %s2, %s1762
      // Predicated region
      $region29: #{biasfree_layernorm.1} parent=27 // pred_check
        %p1764 = pneg %p78
      $region30: #{biasfree_layernorm.1} parent=27 // pred_check_branch
        %1766 = sbr.rel (%p1764) target = $region32
      $region31: #{biasfree_layernorm.1} parent=27 // pred_region
        %s1767 = smul.u32 64, %s13
      $region32: #{biasfree_layernorm.1} parent=27 // pred_fallthru
        _
    $region28: #{biasfree_layernorm.1} parent=5 // pred_fallthru
      _
    %p1768 = scmp.le.s32.totalorder 2, %s8
    // Predicated region
    $region33: #{biasfree_layernorm.1} parent=5 // pred_check
      %p1769 = pneg %p1768
    $region34: #{biasfree_layernorm.1} parent=5 // pred_check_branch
      %1771 = sbr.rel (%p1769) target = $region36
    $region35: #{biasfree_layernorm.1} parent=5 // pred_region
      %s1772 = ssub.s32 %s8, 2
      // Predicated region
      $region37: #{biasfree_layernorm.1} parent=35 // pred_check
        %p1773 = pneg %p84
      $region38: #{biasfree_layernorm.1} parent=35 // pred_check_branch
        %1775 = sbr.rel (%p1773) target = $region40
      $region39: #{biasfree_layernorm.1} parent=35 // pred_region
        %s1776 = smul.u32 64, %s14
        %p1777 = scmp.lt.s32.totalorder %s1776, 127
        %s1778 = scalar_select %p1777, %s1776, 127
        %s1779 = smul.addr %s1778, 8
        %s1780 = scalar_lea.vmem %s2, %s1779
      $region40: #{biasfree_layernorm.1} parent=35 // pred_fallthru
        _
    $region36: #{biasfree_layernorm.1} parent=5 // pred_fallthru
      _
  $region6: #{biasfree_layernorm.1} parent=0 // loop_footer
    %s12 = sadd.s32 1, %s8
  $region7: #{biasfree_layernorm.1} parent=0 // loop_footer_branch
    %7 = sbr.rel target = $region3
  $region8: #{biasfree_layernorm.1} parent=0 // loop_exit
    _

</llo_original>
